<compile_context>
chip_gen: v7x
topology: tpu7x:2x2x1
jax: 0.10.0
libtpu: 0.0.40
codegen_flags: <defaults>
</compile_context>

<pallas_src>
import math

import jax
import jax.numpy as jnp
from jax.experimental import pallas as pl
from jax.experimental.pallas import tpu as pltpu


HIDDEN = 512


def _round_up(x, m):
    return ((x + m - 1) // m) * m


def valuenet_kernel(x_ref, a_ref, w1x_ref, w1a_ref, b1_ref, w2_ref, b2_ref,
                    w3_ref, b3_ref, wo_ref, bo_ref, out_ref):
    # Layer 1: concat([x, a]) @ W1  ==  x @ W1[:O] + a @ W1[O:]
    h = jnp.dot(x_ref[...], w1x_ref[...], preferred_element_type=jnp.float32)
    h = h + jnp.dot(a_ref[...], w1a_ref[...], preferred_element_type=jnp.float32)
    h = jnp.maximum(h + b1_ref[...], 0.0)

    # Layer 2
    h = jnp.dot(h.astype(w2_ref.dtype), w2_ref[...],
                preferred_element_type=jnp.float32)
    h = jnp.maximum(h + b2_ref[...], 0.0)

    # Layer 3
    h = jnp.dot(h.astype(w3_ref.dtype), w3_ref[...],
                preferred_element_type=jnp.float32)
    h = jnp.maximum(h + b3_ref[...], 0.0)

    # Output layer (H -> 1): VPU multiply + XLU lane reduction instead of a
    # nearly-empty MXU pass.  wo is stored as (1, H).
    out = jnp.sum(h * wo_ref[...].astype(jnp.float32), axis=-1, keepdims=True)
    out_ref[...] = out + bo_ref[...]


def value_net_forward(x, a, params, tile_b=256):
    """x: (B, observations), a: (B, actions) -> (B, 1) float32."""
    w1x, w1a, b1, w2, b2, w3, b3, wo, bo = params
    B, O = x.shape
    A = a.shape[1]
    H = w2.shape[0]

    cdtype = w2.dtype  # bf16 compute dtype feeding the MXU
    x = x.astype(cdtype)
    a = a.astype(cdtype)

    # Batch tile: multiple of 16 (bf16 sublane packing); pad B up to a tile
    # multiple and slice the result afterwards.
    tb = min(tile_b, _round_up(B, 16))
    Bp = _round_up(B, tb)
    if Bp != B:
        x = jnp.pad(x, ((0, Bp - B), (0, 0)))
        a = jnp.pad(a, ((0, Bp - B), (0, 0)))

    grid = (Bp // tb,)

    def row_spec(feat):
        return pl.BlockSpec((tb, feat), lambda i: (i, 0))

    def resident(arr):
        # Full-array block, same block index every grid step -> weights stay
        # VMEM-resident across the batch loop (DMA'd once).
        return pl.BlockSpec(arr.shape, lambda i: (0, 0))

    flops = 2 * Bp * ((O + A) * H + H * H + H * H + H)
    bytes_accessed = int(
        sum(int(p.size) * p.dtype.itemsize for p in params)
        + x.size * x.dtype.itemsize + a.size * a.dtype.itemsize
        + Bp * 1 * 4)

    out = pl.pallas_call(
        valuenet_kernel,
        out_shape=jax.ShapeDtypeStruct((Bp, 1), jnp.float32),
        grid=grid,
        in_specs=[row_spec(O), row_spec(A),
                  resident(w1x), resident(w1a), resident(b1),
                  resident(w2), resident(b2),
                  resident(w3), resident(b3),
                  resident(wo), resident(bo)],
        out_specs=pl.BlockSpec((tb, 1), lambda i: (i, 0)),
        compiler_params=pltpu.CompilerParams(
            dimension_semantics=("parallel",)),
        cost_estimate=pl.CostEstimate(
            flops=flops, transcendentals=0, bytes_accessed=bytes_accessed),
    )(x, a, w1x, w1a, b1, w2, b2, w3, b3, wo, bo)

    return out[:B]


def init_params(key, observations, actions, hidden=HIDDEN,
                wdtype=jnp.bfloat16):
    """nn.Linear-style init (uniform +-1/sqrt(fan_in)).

    Weights stored as (in, out) (transpose of PyTorch .weight) in bf16;
    biases as (1, out) f32.  W1 is pre-split into observation/action halves
    and the output weight is stored as (1, hidden) for the VPU reduction.
    """
    def linear(k, fan_in, fan_out):
        kw, kb = jax.random.split(k)
        bound = 1.0 / math.sqrt(float(fan_in))
        w = jax.random.uniform(kw, (fan_in, fan_out), jnp.float32, -bound, bound)
        b = jax.random.uniform(kb, (1, fan_out), jnp.float32, -bound, bound)
        return w.astype(wdtype), b

    k1, k2, k3, k4 = jax.random.split(key, 4)
    w1, b1 = linear(k1, observations + actions, hidden)
    w2, b2 = linear(k2, hidden, hidden)
    w3, b3 = linear(k3, hidden, hidden)
    wo, bo = linear(k4, hidden, 1)

    w1x = w1[:observations]          # (O, H)
    w1a = w1[observations:]          # (A, H)
    wo = wo.T                        # (1, H)
    return (w1x, w1a, b1, w2, b2, w3, b3, wo, bo)


def reference_forward(x, a, params):
    """Pure-JAX f32 reference using the same (bf16-quantized) weights."""
    w1x, w1a, b1, w2, b2, w3, b3, wo, bo = params
    f = lambda t: t.astype(jnp.float32)
    h = jnp.maximum(f(x) @ f(w1x) + f(a) @ f(w1a) + b1, 0.0)
    h = jnp.maximum(h @ f(w2) + b2, 0.0)
    h = jnp.maximum(h @ f(w3) + b3, 0.0)
    return h @ f(wo).T + bo


if __name__ == "__main__":
    observations, actions, batch = 24, 8, 8

    key = jax.random.PRNGKey(0)
    key, kx, ka = jax.random.split(key, 3)
    # Inputs quantized to bf16 up front so kernel and reference see the same
    # input values (kernel feeds them to a bf16 MXU anyway).
    x = jax.random.normal(kx, (batch, observations), jnp.float32).astype(jnp.bfloat16)
    a = jax.random.normal(ka, (batch, actions), jnp.float32).astype(jnp.bfloat16)

    params = init_params(key, observations, actions)

    out = value_net_forward(x, a, params)
    out = jax.block_until_ready(out)

    ref = reference_forward(x, a, params)
    assert out.shape == (batch, 1)
    # Looser tolerance than the f32 version: intermediate activations are
    # re-quantized to bf16 before each MXU pass (expected, not a bug).
    assert jnp.allclose(out, ref, atol=2e-2, rtol=2e-2), (out, ref)

    print("KERNEL_OK")
</pallas_src>

<mosaic_0001>
module attributes {stable_mosaic.version = 11 : i64} {
  func.func @valuenet_kernel(%arg0: i32, %arg1: memref<16x24xbf16, #tpu.memory_space<vmem>>, %arg2: memref<16x8xbf16, #tpu.memory_space<vmem>>, %arg3: memref<24x512xbf16, #tpu.memory_space<vmem>>, %arg4: memref<8x512xbf16, #tpu.memory_space<vmem>>, %arg5: memref<1x512xf32, #tpu.memory_space<vmem>>, %arg6: memref<512x512xbf16, #tpu.memory_space<vmem>>, %arg7: memref<1x512xf32, #tpu.memory_space<vmem>>, %arg8: memref<512x512xbf16, #tpu.memory_space<vmem>>, %arg9: memref<1x512xf32, #tpu.memory_space<vmem>>, %arg10: memref<1x512xbf16, #tpu.memory_space<vmem>>, %arg11: memref<1x1xf32, #tpu.memory_space<vmem>>, %arg12: memref<16x1xf32, #tpu.memory_space<vmem>>) attributes {dimension_semantics = [#tpu.dimension_semantics<parallel>], iteration_bounds = array<i64: 1>, scalar_prefetch = 0 : i64, scratch_operands = 0 : i64, tpu.core_type = #tpu.core_type<tc>, window_params = [{transform_indices = @transform_0, window_bounds = array<i64: 16, 24>}, {transform_indices = @transform_1, window_bounds = array<i64: 16, 8>}, {pipeline_mode = #tpu.pipeline_mode<synchronous>, transform_indices = @transform_2, window_bounds = array<i64: 24, 512>}, {pipeline_mode = #tpu.pipeline_mode<synchronous>, transform_indices = @transform_3, window_bounds = array<i64: 8, 512>}, {pipeline_mode = #tpu.pipeline_mode<synchronous>, transform_indices = @transform_4, window_bounds = array<i64: 1, 512>}, {pipeline_mode = #tpu.pipeline_mode<synchronous>, transform_indices = @transform_5, window_bounds = array<i64: 512, 512>}, {pipeline_mode = #tpu.pipeline_mode<synchronous>, transform_indices = @transform_6, window_bounds = array<i64: 1, 512>}, {pipeline_mode = #tpu.pipeline_mode<synchronous>, transform_indices = @transform_7, window_bounds = array<i64: 512, 512>}, {pipeline_mode = #tpu.pipeline_mode<synchronous>, transform_indices = @transform_8, window_bounds = array<i64: 1, 512>}, {pipeline_mode = #tpu.pipeline_mode<synchronous>, transform_indices = @transform_9, window_bounds = array<i64: 1, 512>}, {pipeline_mode = #tpu.pipeline_mode<synchronous>, transform_indices = @transform_10, window_bounds = array<i64: 1, 1>}, {transform_indices = @transform_11, window_bounds = array<i64: 16, 1>}]} {
    %c0 = arith.constant 0 : index
    %c0_0 = arith.constant 0 : index
    %0 = vector.load %arg1[%c0, %c0_0] : memref<16x24xbf16, #tpu.memory_space<vmem>>, vector<16x24xbf16>
    %c0_1 = arith.constant 0 : index
    %c0_2 = arith.constant 0 : index
    %1 = vector.load %arg3[%c0_1, %c0_2] : memref<24x512xbf16, #tpu.memory_space<vmem>>, vector<24x512xbf16>
    %cst = arith.constant dense<0.000000e+00> : vector<16x512xf32>
    %2 = tpu.matmul %0, %1, %cst {dimension_numbers = #tpu.dot_dimension_numbers<[1], [0], [0], [1], [0, 0, 1, 1], [], []>} : vector<16x24xbf16>, vector<24x512xbf16>, vector<16x512xf32> -> vector<16x512xf32>
    %c0_3 = arith.constant 0 : index
    %c0_4 = arith.constant 0 : index
    %3 = vector.load %arg2[%c0_3, %c0_4] : memref<16x8xbf16, #tpu.memory_space<vmem>>, vector<16x8xbf16>
    %c0_5 = arith.constant 0 : index
    %c0_6 = arith.constant 0 : index
    %4 = vector.load %arg4[%c0_5, %c0_6] : memref<8x512xbf16, #tpu.memory_space<vmem>>, vector<8x512xbf16>
    %cst_7 = arith.constant dense<0.000000e+00> : vector<16x512xf32>
    %5 = tpu.matmul %3, %4, %cst_7 {dimension_numbers = #tpu.dot_dimension_numbers<[1], [0], [0], [1], [0, 0, 1, 1], [], []>} : vector<16x8xbf16>, vector<8x512xbf16>, vector<16x512xf32> -> vector<16x512xf32>
    %6 = arith.addf %2, %5 : vector<16x512xf32>
    %c0_8 = arith.constant 0 : index
    %c0_9 = arith.constant 0 : index
    %7 = vector.load %arg5[%c0_8, %c0_9] : memref<1x512xf32, #tpu.memory_space<vmem>>, vector<1x512xf32>
    %8 = vector.broadcast %7 : vector<1x512xf32> to vector<16x512xf32>
    %9 = arith.addf %6, %8 : vector<16x512xf32>
    %cst_10 = arith.constant 0.000000e+00 : f32
    %10 = vector.broadcast %cst_10 : f32 to vector<16x512xf32>
    %11 = arith.maximumf %9, %10 : vector<16x512xf32>
    %12 = arith.truncf %11 : vector<16x512xf32> to vector<16x512xbf16>
    %c0_11 = arith.constant 0 : index
    %c0_12 = arith.constant 0 : index
    %13 = vector.load %arg6[%c0_11, %c0_12] : memref<512x512xbf16, #tpu.memory_space<vmem>>, vector<512x512xbf16>
    %cst_13 = arith.constant dense<0.000000e+00> : vector<16x512xf32>
    %14 = tpu.matmul %12, %13, %cst_13 {dimension_numbers = #tpu.dot_dimension_numbers<[1], [0], [0], [1], [0, 0, 1, 1], [], []>} : vector<16x512xbf16>, vector<512x512xbf16>, vector<16x512xf32> -> vector<16x512xf32>
    %c0_14 = arith.constant 0 : index
    %c0_15 = arith.constant 0 : index
    %15 = vector.load %arg7[%c0_14, %c0_15] : memref<1x512xf32, #tpu.memory_space<vmem>>, vector<1x512xf32>
    %16 = vector.broadcast %15 : vector<1x512xf32> to vector<16x512xf32>
    %17 = arith.addf %14, %16 : vector<16x512xf32>
    %cst_16 = arith.constant 0.000000e+00 : f32
    %18 = vector.broadcast %cst_16 : f32 to vector<16x512xf32>
    %19 = arith.maximumf %17, %18 : vector<16x512xf32>
    %20 = arith.truncf %19 : vector<16x512xf32> to vector<16x512xbf16>
    %c0_17 = arith.constant 0 : index
    %c0_18 = arith.constant 0 : index
    %21 = vector.load %arg8[%c0_17, %c0_18] : memref<512x512xbf16, #tpu.memory_space<vmem>>, vector<512x512xbf16>
    %cst_19 = arith.constant dense<0.000000e+00> : vector<16x512xf32>
    %22 = tpu.matmul %20, %21, %cst_19 {dimension_numbers = #tpu.dot_dimension_numbers<[1], [0], [0], [1], [0, 0, 1, 1], [], []>} : vector<16x512xbf16>, vector<512x512xbf16>, vector<16x512xf32> -> vector<16x512xf32>
    %c0_20 = arith.constant 0 : index
    %c0_21 = arith.constant 0 : index
    %23 = vector.load %arg9[%c0_20, %c0_21] : memref<1x512xf32, #tpu.memory_space<vmem>>, vector<1x512xf32>
    %24 = vector.broadcast %23 : vector<1x512xf32> to vector<16x512xf32>
    %25 = arith.addf %22, %24 : vector<16x512xf32>
    %cst_22 = arith.constant 0.000000e+00 : f32
    %26 = vector.broadcast %cst_22 : f32 to vector<16x512xf32>
    %27 = arith.maximumf %25, %26 : vector<16x512xf32>
    %c0_23 = arith.constant 0 : index
    %c0_24 = arith.constant 0 : index
    %28 = vector.load %arg10[%c0_23, %c0_24] : memref<1x512xbf16, #tpu.memory_space<vmem>>, vector<1x512xbf16>
    %29 = arith.extf %28 : vector<1x512xbf16> to vector<1x512xf32>
    %30 = vector.broadcast %29 : vector<1x512xf32> to vector<16x512xf32>
    %31 = arith.mulf %27, %30 : vector<16x512xf32>
    %cst_25 = arith.constant dense<0.000000e+00> : vector<16xf32>
    %32 = vector.multi_reduction <add>, %31, %cst_25 [1] : vector<16x512xf32> to vector<16xf32>
    %33 = vector.shape_cast %32 : vector<16xf32> to vector<16x1xf32>
    %c0_26 = arith.constant 0 : index
    %c0_27 = arith.constant 0 : index
    %34 = vector.load %arg11[%c0_26, %c0_27] : memref<1x1xf32, #tpu.memory_space<vmem>>, vector<1x1xf32>
    %35 = vector.broadcast %34 : vector<1x1xf32> to vector<16x1xf32>
    %36 = arith.addf %33, %35 : vector<16x1xf32>
    %c0_28 = arith.constant 0 : index
    %c0_29 = arith.constant 0 : index
    %37 = vector.load %arg12[%c0_28, %c0_29] : memref<16x1xf32, #tpu.memory_space<vmem>>, vector<16x1xf32>
    tpu.vector_store %arg12[%c0_28, %c0_29], %36 {strides = array<i32>} : memref<16x1xf32, #tpu.memory_space<vmem>>, vector<16x1xf32>,
    return
  }
  func.func @transform_0(%arg0: i32) -> (i32, i32) {
    %c0_i32 = arith.constant 0 : i32
    %c0_i32_0 = arith.constant 0 : i32
    return %arg0, %c0_i32 : i32, i32
  }
  func.func @transform_1(%arg0: i32) -> (i32, i32) {
    %c0_i32 = arith.constant 0 : i32
    %c0_i32_0 = arith.constant 0 : i32
    return %arg0, %c0_i32 : i32, i32
  }
  func.func @transform_2(%arg0: i32) -> (i32, i32) {
    %c0_i32 = arith.constant 0 : i32
    %c0_i32_0 = arith.constant 0 : i32
    %c0_i32_1 = arith.constant 0 : i32
    return %c0_i32, %c0_i32_0 : i32, i32
  }
  func.func @transform_3(%arg0: i32) -> (i32, i32) {
    %c0_i32 = arith.constant 0 : i32
    %c0_i32_0 = arith.constant 0 : i32
    %c0_i32_1 = arith.constant 0 : i32
    return %c0_i32, %c0_i32_0 : i32, i32
  }
  func.func @transform_4(%arg0: i32) -> (i32, i32) {
    %c0_i32 = arith.constant 0 : i32
    %c0_i32_0 = arith.constant 0 : i32
    %c0_i32_1 = arith.constant 0 : i32
    return %c0_i32, %c0_i32_0 : i32, i32
  }
  func.func @transform_5(%arg0: i32) -> (i32, i32) {
    %c0_i32 = arith.constant 0 : i32
    %c0_i32_0 = arith.constant 0 : i32
    %c0_i32_1 = arith.constant 0 : i32
    return %c0_i32, %c0_i32_0 : i32, i32
  }
  func.func @transform_6(%arg0: i32) -> (i32, i32) {
    %c0_i32 = arith.constant 0 : i32
    %c0_i32_0 = arith.constant 0 : i32
    %c0_i32_1 = arith.constant 0 : i32
    return %c0_i32, %c0_i32_0 : i32, i32
  }
  func.func @transform_7(%arg0: i32) -> (i32, i32) {
    %c0_i32 = arith.constant 0 : i32
    %c0_i32_0 = arith.constant 0 : i32
    %c0_i32_1 = arith.constant 0 : i32
    return %c0_i32, %c0_i32_0 : i32, i32
  }
  func.func @transform_8(%arg0: i32) -> (i32, i32) {
    %c0_i32 = arith.constant 0 : i32
    %c0_i32_0 = arith.constant 0 : i32
    %c0_i32_1 = arith.constant 0 : i32
    return %c0_i32, %c0_i32_0 : i32, i32
  }
  func.func @transform_9(%arg0: i32) -> (i32, i32) {
    %c0_i32 = arith.constant 0 : i32
    %c0_i32_0 = arith.constant 0 : i32
    %c0_i32_1 = arith.constant 0 : i32
    return %c0_i32, %c0_i32_0 : i32, i32
  }
  func.func @transform_10(%arg0: i32) -> (i32, i32) {
    %c0_i32 = arith.constant 0 : i32
    %c0_i32_0 = arith.constant 0 : i32
    %c0_i32_1 = arith.constant 0 : i32
    return %c0_i32, %c0_i32_0 : i32, i32
  }
  func.func @transform_11(%arg0: i32) -> (i32, i32) {
    %c0_i32 = arith.constant 0 : i32
    %c0_i32_0 = arith.constant 0 : i32
    return %arg0, %c0_i32 : i32, i32
  }
}

</mosaic_0001>

<llo_original>
// kernel: tpu_custom_call.1
$region0: #{tpu_custom_call.1}
  #allocation0 [shape = 'u32[]', space=smem, size = 0x4, offset = 0x4, fixed_abs, tag = 'smem constant byte address 0x4 - core index']
  #allocation1 [shape = 'u32[144,128]{1,0:T(1,128)}', space=vmem, size = 0x12000, scoped, tag = 'internal scratch']
  #allocation2 [shape = 'f32[1,1]{1,0:T(1,128)S(1)}', space=vmem, size = 0x200, scoped, tag = 'scoped memory for tpu_custom_call.1']
  %s0 = inlined_call_operand.vmem [shape: bf16[16,24], index: 0, kind: input, shape index: {}]
  %s1 = inlined_call_operand.vmem [shape: bf16[16,8], index: 1, kind: input, shape index: {}]
  %s2 = inlined_call_operand.hbm [shape: bf16[24,512], index: 2, kind: input, shape index: {}]
  %s3 = inlined_call_operand.vmem [shape: bf16[8,512], index: 3, kind: input, shape index: {}]
  %s4 = inlined_call_operand.vmem [shape: f32[1,512], index: 4, kind: input, shape index: {}]
  %s5 = inlined_call_operand.hbm [shape: bf16[512,512], index: 5, kind: input, shape index: {}]
  %s6 = inlined_call_operand.vmem [shape: f32[1,512], index: 6, kind: input, shape index: {}]
  %s7 = inlined_call_operand.hbm [shape: bf16[512,512], index: 7, kind: input, shape index: {}]
  %s8 = inlined_call_operand.vmem [shape: f32[1,512], index: 8, kind: input, shape index: {}]
  %s9 = inlined_call_operand.vmem [shape: bf16[1,512], index: 9, kind: input, shape index: {}]
  %s10 = inlined_call_operand.<no memory space> [shape: f32[1,1], index: 10, kind: input, shape index: {}]
  %s11 = inlined_call_operand.vmem [shape: f32[16,1], index: 11, kind: output, shape index: {}]
  %s12 = sld [smem:[#allocation0]]
  $region66: #{tpu_custom_call.1} parent=0
    _
  %s14 = ssub.s32 1, %s12
  %s15 = scalar_select 0, %s14, %s12
  %v16 = vstv %s10
  %17 = vst [vmem:[#allocation2] sm:$0x1] %v16
  $region1: #{tpu_custom_call.1} parent=0
    #allocation3 [shape = 'u8[24576]{0}', space=vmem, size = 0x6000, scoped, tag = 'input window, operand 2, single buffered']
    #allocation4 [shape = 's32[1]{0}', space=sflag, size = 0x4, scoped, tag = 'scoped memory for tpu_custom_call.1']
    #allocation5 [shape = 'u8[524288]{0}', space=vmem, size = 0x80000, scoped, tag = 'input window, operand 5, single buffered']
    #allocation6 [shape = 's32[1]{0}', space=sflag, size = 0x4, scoped, tag = 'scoped memory for tpu_custom_call.1']
    #allocation7 [shape = 'u8[524288]{0}', space=vmem, size = 0x80000, scoped, tag = 'input window, operand 7, single buffered']
    %18 = vsyncpa [#allocation4], 0
    %19 = vsyncpa [#allocation6], 0
    // Predicated region
    $region2: #{tpu_custom_call.1} parent=1 // pred_check
      _
    $region3: #{tpu_custom_call.1} parent=1 // pred_check_branch
      %21 = sbr.rel (0) target = $region5
    $region4: #{tpu_custom_call.1} parent=1 // pred_region
      _
    $region5: #{tpu_custom_call.1} parent=1 // pred_fallthru
      _
    // Predicated region
    $region6: #{tpu_custom_call.1} parent=1 // pred_check
      _
    $region7: #{tpu_custom_call.1} parent=1 // pred_check_branch
      %23 = sbr.rel (0) target = $region9
    $region8: #{tpu_custom_call.1} parent=1 // pred_region
      _
    $region9: #{tpu_custom_call.1} parent=1 // pred_fallthru
      _
    // Predicated region
    $region10: #{tpu_custom_call.1} parent=1 // pred_check
      _
    $region11: #{tpu_custom_call.1} parent=1 // pred_check_branch
      %25 = sbr.rel (0) target = $region13
    $region12: #{tpu_custom_call.1} parent=1 // pred_region
      %s27 = ssub.s32 768, 768
      %28 = vsyncadd [#allocation4], %s27
      %s29 = sshll.u32 [#allocation3], 4
      %s30 = int_to_ptr.vmem [resolvable:$true] %s29
      %35 = dma.hbm_to_vmem [thread:$0]  %s2, 768, %s30, [#allocation4], 256, 256, 16
    $region13: #{tpu_custom_call.1} parent=1 // pred_fallthru
      _
    // Predicated region
    $region14: #{tpu_custom_call.1} parent=1 // pred_check
      _
    $region15: #{tpu_custom_call.1} parent=1 // pred_check_branch
      %37 = sbr.rel (0) target = $region17
    $region16: #{tpu_custom_call.1} parent=1 // pred_region
      _
    $region17: #{tpu_custom_call.1} parent=1 // pred_fallthru
      _
    // Predicated region
    $region18: #{tpu_custom_call.1} parent=1 // pred_check
      _
    $region19: #{tpu_custom_call.1} parent=1 // pred_check_branch
      %39 = sbr.rel (0) target = $region21
    $region20: #{tpu_custom_call.1} parent=1 // pred_region
      _
    $region21: #{tpu_custom_call.1} parent=1 // pred_fallthru
      _
    // Predicated region
    $region22: #{tpu_custom_call.1} parent=1 // pred_check
      _
    $region23: #{tpu_custom_call.1} parent=1 // pred_check_branch
      %41 = sbr.rel (0) target = $region25
    $region24: #{tpu_custom_call.1} parent=1 // pred_region
      %s43 = ssub.s32 16384, 16384
      %44 = vsyncadd [#allocation6], %s43
      %s45 = sshll.u32 [#allocation5], 4
      %s46 = int_to_ptr.vmem [resolvable:$true] %s45
      %51 = dma.hbm_to_vmem [thread:$0]  %s5, 16384, %s46, [#allocation6], 256, 256, 16
    $region25: #{tpu_custom_call.1} parent=1 // pred_fallthru
      _
    // Predicated region
    $region26: #{tpu_custom_call.1} parent=1 // pred_check
      _
    $region27: #{tpu_custom_call.1} parent=1 // pred_check_branch
      %53 = sbr.rel (0) target = $region29
    $region28: #{tpu_custom_call.1} parent=1 // pred_region
      _
    $region29: #{tpu_custom_call.1} parent=1 // pred_fallthru
      _
    // Predicated region
    $region30: #{tpu_custom_call.1} parent=1 // pred_check
      _
    $region31: #{tpu_custom_call.1} parent=1 // pred_check_branch
      %55 = sbr.rel (0) target = $region33
    $region32: #{tpu_custom_call.1} parent=1 // pred_region
      %s57 = ssub.s32 16384, 16384
      %58 = vsyncadd [#allocation6], %s57
      %s59 = sshll.u32 [#allocation7], 4
      %s60 = int_to_ptr.vmem [resolvable:$true] %s59
      %65 = dma.hbm_to_vmem [thread:$0]  %s7, 16384, %s60, [#allocation6], 256, 256, 16
    $region33: #{tpu_custom_call.1} parent=1 // pred_fallthru
      _
    // Predicated region
    $region34: #{tpu_custom_call.1} parent=1 // pred_check
      _
    $region35: #{tpu_custom_call.1} parent=1 // pred_check_branch
      %67 = sbr.rel (0) target = $region37
    $region36: #{tpu_custom_call.1} parent=1 // pred_region
      _
    $region37: #{tpu_custom_call.1} parent=1 // pred_fallthru
      _
    // Predicated region
    $region38: #{tpu_custom_call.1} parent=1 // pred_check
      _
    $region39: #{tpu_custom_call.1} parent=1 // pred_check_branch
      %69 = sbr.rel (0) target = $region41
    $region40: #{tpu_custom_call.1} parent=1 // pred_region
      _
    $region41: #{tpu_custom_call.1} parent=1 // pred_fallthru
      _
    // Predicated region
    $region42: #{tpu_custom_call.1} parent=1 // pred_check
      _
    $region43: #{tpu_custom_call.1} parent=1 // pred_check_branch
      %71 = sbr.rel (0) target = $region45
    $region44: #{tpu_custom_call.1} parent=1 // pred_region
      _
    $region45: #{tpu_custom_call.1} parent=1 // pred_fallthru
      _
    // Predicated region
    $region46: #{tpu_custom_call.1} parent=1 // pred_check
      _
    $region47: #{tpu_custom_call.1} parent=1 // pred_check_branch
      %73 = sbr.rel (0) target = $region49
    $region48: #{tpu_custom_call.1} parent=1 // pred_region
      %74 = dma.done [#allocation4], 768
    $region49: #{tpu_custom_call.1} parent=1 // pred_fallthru
      _
    // Predicated region
    $region50: #{tpu_custom_call.1} parent=1 // pred_check
      _
    $region51: #{tpu_custom_call.1} parent=1 // pred_check_branch
      %76 = sbr.rel (0) target = $region53
    $region52: #{tpu_custom_call.1} parent=1 // pred_region
      %77 = dma.done [#allocation6], 16384
    $region53: #{tpu_custom_call.1} parent=1 // pred_fallthru
      _
    // Predicated region
    $region54: #{tpu_custom_call.1} parent=1 // pred_check
      _
    $region55: #{tpu_custom_call.1} parent=1 // pred_check_branch
      %79 = sbr.rel (0) target = $region57
    $region56: #{tpu_custom_call.1} parent=1 // pred_region
      %80 = dma.done [#allocation6], 16384
    $region57: #{tpu_custom_call.1} parent=1 // pred_fallthru
      _
    %v82 = vld [vmem:[%s0] sm:$0xf]
    %v83 = vld [vmem:[%s0 + $0x4] sm:$0xf]
    %v84 = vld [vmem:[#allocation3] sm:$0xff]
    %v85 = vld [vmem:[#allocation3 + $0x8] sm:$0xff]
    %v86 = vld [vmem:[#allocation3 + $0x10] sm:$0xff]
    %v87 = vld [vmem:[#allocation3 + $0x18] sm:$0xff]
    %v88 = vld [vmem:[#allocation3 + $0x20] sm:$0xff]
    %v89 = vld [vmem:[#allocation3 + $0x28] sm:$0xff]
    %v90 = vld [vmem:[%s1] sm:$0xf]
    %v91 = vld [vmem:[%s1 + $0x4] sm:$0xf]
    %v92 = vld [vmem:[%s3] sm:$0xff]
    %v93 = vld [vmem:[%s3 + $0x8] sm:$0xff]
    %v96 = vunpack.c.l.b16 %v90
    %v97 = vunpack.c.l.b16 %v91
    %v98 = vpack.c.b16 %v97, %v96
    %v101 = vunpack.c.l.b16 %v92
    %v102 = vunpack.c.h.b16 %v92
    %v103 = vunpack.c.l.b16 %v93
    %v104 = vunpack.c.h.b16 %v93
    %v105 = vpack.c.b16 %v101, %v101
    %v106 = vpack.c.b16 %v102, %v102
    %v107 = vpack.c.b16 %v103, %v103
    %v108 = vpack.c.b16 %v104, %v104
    %vm109 = vcmask 64512
    %v111 = vsel %vm109, %v98, 0
    %vm113 = vcmask 1043456
    %v115 = vsel %vm113, %v105, 0
    %v118 = vsel %vm113, %v106, 0
    %v121 = vsel %vm113, %v107, 0
    %v124 = vsel %vm113, %v108, 0
    %126 = vmatprep.subr.bf16.mxu0 %v118
    %127 = vmatpush1.bf16.msra.mxu0 %v115
    %128 = vmatprep.subr.bf16.mxu0 0
    %129 = vmatpush1.bf16.msra.mxu0 0
    %130 = vmatprep.subr.bf16.mxu0 0
    %131 = vmatpush1.bf16.msra.mxu0 0
    %132 = vmatprep.subr.bf16.mxu0 0
    %133 = vmatpush1.bf16.msra.mxu0 0
    %134 = vmatprep.subr.bf16.mxu0 0
    %135 = vmatpush1.bf16.msra.mxu0 0
    %136 = vmatprep.subr.bf16.mxu0 0
    %137 = vmatpush1.bf16.msra.mxu0 0
    %138 = vmatprep.subr.bf16.mxu0 0
    %139 = vmatpush1.bf16.msra.mxu0 0
    %140 = vmatprep.subr.bf16.mxu0 0
    %141 = vmatpush1.bf16.msra.mxu0 0
    %142 = vmatprep.subr.bf16.mxu0 0
    %143 = vmatpush1.bf16.msra.mxu0 0
    %144 = vmatprep.subr.bf16.mxu0 0
    %145 = vmatpush1.bf16.msra.mxu0 0
    %146 = vmatprep.subr.bf16.mxu0 0
    %147 = vmatpush1.bf16.msra.mxu0 0
    %148 = vmatprep.subr.bf16.mxu0 0
    %149 = vmatpush1.bf16.msra.mxu0 0
    %150 = vmatprep.subr.bf16.mxu0 0
    %151 = vmatpush1.bf16.msra.mxu0 0
    %152 = vmatprep.subr.bf16.mxu0 0
    %153 = vmatpush1.bf16.msra.mxu0 0
    %154 = vmatprep.subr.bf16.mxu0 0
    %155 = vmatpush1.bf16.msra.mxu0 0
    %156 = vmatprep.subr.bf16.mxu0 0
    %157 = vmatpush1.bf16.msra.mxu0 0
    %158 = vmatprep.mubr.bf16.mxu0 0
    %159 = vmatmul.mubr.bf16.gmra.mrb[0].mxu0 %v111
    %v160 = vpop.f32.mrb[0].mxu0
    %v161 = vadd.f32 0.0, %v160
    %v162 = vpop.f32.mrb[0].mxu0
    %v163 = vadd.f32 0.0, %v162
    %v164 = vpop.f32.mrb[0].mxu0
    %v165 = vadd.f32 0.0, %v164
    %v166 = vpop.f32.mrb[0].mxu0
    %v167 = vadd.f32 0.0, %v166
    %168 = vdwg.mxu0
    %169 = vmatprep.subr.bf16.mxu0 %v124
    %170 = vmatpush1.bf16.msra.mxu0 %v121
    %171 = vmatprep.subr.bf16.mxu0 0
    %172 = vmatpush1.bf16.msra.mxu0 0
    %173 = vmatprep.subr.bf16.mxu0 0
    %174 = vmatpush1.bf16.msra.mxu0 0
    %175 = vmatprep.subr.bf16.mxu0 0
    %176 = vmatpush1.bf16.msra.mxu0 0
    %177 = vmatprep.subr.bf16.mxu0 0
    %178 = vmatpush1.bf16.msra.mxu0 0
    %179 = vmatprep.subr.bf16.mxu0 0
    %180 = vmatpush1.bf16.msra.mxu0 0
    %181 = vmatprep.subr.bf16.mxu0 0
    %182 = vmatpush1.bf16.msra.mxu0 0
    %183 = vmatprep.subr.bf16.mxu0 0
    %184 = vmatpush1.bf16.msra.mxu0 0
    %185 = vmatprep.subr.bf16.mxu0 0
    %186 = vmatpush1.bf16.msra.mxu0 0
    %187 = vmatprep.subr.bf16.mxu0 0
    %188 = vmatpush1.bf16.msra.mxu0 0
    %189 = vmatprep.subr.bf16.mxu0 0
    %190 = vmatpush1.bf16.msra.mxu0 0
    %191 = vmatprep.subr.bf16.mxu0 0
    %192 = vmatpush1.bf16.msra.mxu0 0
    %193 = vmatprep.subr.bf16.mxu0 0
    %194 = vmatpush1.bf16.msra.mxu0 0
    %195 = vmatprep.subr.bf16.mxu0 0
    %196 = vmatpush1.bf16.msra.mxu0 0
    %197 = vmatprep.subr.bf16.mxu0 0
    %198 = vmatpush1.bf16.msra.mxu0 0
    %199 = vmatprep.subr.bf16.mxu0 0
    %200 = vmatpush1.bf16.msra.mxu0 0
    %201 = vmatprep.mubr.bf16.mxu0 0
    %202 = vmatmul.mubr.bf16.gmra.mrb[0].mxu0 %v111
    %v203 = vpop.f32.mrb[0].mxu0
    %v204 = vadd.f32 0.0, %v203
    %v205 = vpop.f32.mrb[0].mxu0
    %v206 = vadd.f32 0.0, %v205
    %v207 = vpop.f32.mrb[0].mxu0
    %v208 = vadd.f32 0.0, %v207
    %v209 = vpop.f32.mrb[0].mxu0
    %v210 = vadd.f32 0.0, %v209
    %211 = vdwg.mxu0
    %v214 = vunpack.c.l.b16 %v82
    %v215 = vunpack.c.l.b16 %v83
    %v216 = vpack.c.b16 %v215, %v214
    %v223 = vunpack.c.l.b16 %v84
    %v224 = vunpack.c.h.b16 %v84
    %v225 = vunpack.c.l.b16 %v85
    %v226 = vunpack.c.h.b16 %v85
    %v227 = vunpack.c.l.b16 %v86
    %v228 = vunpack.c.h.b16 %v86
    %v229 = vunpack.c.l.b16 %v87
    %v230 = vunpack.c.h.b16 %v87
    %v231 = vunpack.c.l.b16 %v88
    %v232 = vunpack.c.h.b16 %v88
    %v233 = vunpack.c.l.b16 %v89
    %v234 = vunpack.c.h.b16 %v89
    %v235 = vpack.c.b16 %v227, %v223
    %v236 = vpack.c.b16 %v228, %v224
    %v237 = vpack.c.b16 %v229, %v225
    %v238 = vpack.c.b16 %v230, %v226
    %v239 = vpack.c.b16 %v231, %v231
    %v240 = vpack.c.b16 %v232, %v232
    %v241 = vpack.c.b16 %v233, %v233
    %v242 = vpack.c.b16 %v234, %v234
    %vm247 = vcmask 195584
    %v249 = vsel %vm247, %v216, 0
    %v252 = vsel %vm113, %v239, 0
    %v255 = vsel %vm113, %v240, 0
    %v258 = vsel %vm113, %v241, 0
    %v261 = vsel %vm113, %v242, 0
    %263 = vmatprep.subr.bf16.mxu0 %v236
    %264 = vmatpush1.bf16.msra.mxu0 %v235
    %265 = vmatprep.subr.bf16.mxu0 %v255
    %266 = vmatpush1.bf16.msra.mxu0 %v252
    %267 = vmatprep.subr.bf16.mxu0 0
    %268 = vmatpush1.bf16.msra.mxu0 0
    %269 = vmatprep.subr.bf16.mxu0 0
    %270 = vmatpush1.bf16.msra.mxu0 0
    %271 = vmatprep.subr.bf16.mxu0 0
    %272 = vmatpush1.bf16.msra.mxu0 0
    %273 = vmatprep.subr.bf16.mxu0 0
    %274 = vmatpush1.bf16.msra.mxu0 0
    %275 = vmatprep.subr.bf16.mxu0 0
    %276 = vmatpush1.bf16.msra.mxu0 0
    %277 = vmatprep.subr.bf16.mxu0 0
    %278 = vmatpush1.bf16.msra.mxu0 0
    %279 = vmatprep.subr.bf16.mxu0 0
    %280 = vmatpush1.bf16.msra.mxu0 0
    %281 = vmatprep.subr.bf16.mxu0 0
    %282 = vmatpush1.bf16.msra.mxu0 0
    %283 = vmatprep.subr.bf16.mxu0 0
    %284 = vmatpush1.bf16.msra.mxu0 0
    %285 = vmatprep.subr.bf16.mxu0 0
    %286 = vmatpush1.bf16.msra.mxu0 0
    %287 = vmatprep.subr.bf16.mxu0 0
    %288 = vmatpush1.bf16.msra.mxu0 0
    %289 = vmatprep.subr.bf16.mxu0 0
    %290 = vmatpush1.bf16.msra.mxu0 0
    %291 = vmatprep.subr.bf16.mxu0 0
    %292 = vmatpush1.bf16.msra.mxu0 0
    %293 = vmatprep.subr.bf16.mxu0 0
    %294 = vmatpush1.bf16.msra.mxu0 0
    %295 = vmatprep.mubr.bf16.mxu0 0
    %296 = vmatmul.mubr.bf16.gmra.mrb[0].mxu0 %v249
    %v297 = vpop.f32.mrb[0].mxu0
    %v298 = vadd.f32 %v161, %v297
    %v299 = vpop.f32.mrb[0].mxu0
    %v300 = vadd.f32 %v163, %v299
    %v301 = vpop.f32.mrb[0].mxu0
    %v302 = vadd.f32 %v165, %v301
    %v303 = vpop.f32.mrb[0].mxu0
    %v304 = vadd.f32 %v167, %v303
    %305 = vdwg.mxu0
    %306 = vmatprep.subr.bf16.mxu0 %v238
    %307 = vmatpush1.bf16.msra.mxu0 %v237
    %308 = vmatprep.subr.bf16.mxu0 %v261
    %309 = vmatpush1.bf16.msra.mxu0 %v258
    %310 = vmatprep.subr.bf16.mxu0 0
    %311 = vmatpush1.bf16.msra.mxu0 0
    %312 = vmatprep.subr.bf16.mxu0 0
    %313 = vmatpush1.bf16.msra.mxu0 0
    %314 = vmatprep.subr.bf16.mxu0 0
    %315 = vmatpush1.bf16.msra.mxu0 0
    %316 = vmatprep.subr.bf16.mxu0 0
    %317 = vmatpush1.bf16.msra.mxu0 0
    %318 = vmatprep.subr.bf16.mxu0 0
    %319 = vmatpush1.bf16.msra.mxu0 0
    %320 = vmatprep.subr.bf16.mxu0 0
    %321 = vmatpush1.bf16.msra.mxu0 0
    %322 = vmatprep.subr.bf16.mxu0 0
    %323 = vmatpush1.bf16.msra.mxu0 0
    %324 = vmatprep.subr.bf16.mxu0 0
    %325 = vmatpush1.bf16.msra.mxu0 0
    %326 = vmatprep.subr.bf16.mxu0 0
    %327 = vmatpush1.bf16.msra.mxu0 0
    %328 = vmatprep.subr.bf16.mxu0 0
    %329 = vmatpush1.bf16.msra.mxu0 0
    %330 = vmatprep.subr.bf16.mxu0 0
    %331 = vmatpush1.bf16.msra.mxu0 0
    %332 = vmatprep.subr.bf16.mxu0 0
    %333 = vmatpush1.bf16.msra.mxu0 0
    %334 = vmatprep.subr.bf16.mxu0 0
    %335 = vmatpush1.bf16.msra.mxu0 0
    %336 = vmatprep.subr.bf16.mxu0 0
    %337 = vmatpush1.bf16.msra.mxu0 0
    %338 = vmatprep.mubr.bf16.mxu0 0
    %339 = vmatmul.mubr.bf16.gmra.mrb[0].mxu0 %v249
    %v340 = vpop.f32.mrb[0].mxu0
    %v341 = vadd.f32 %v204, %v340
    %v342 = vpop.f32.mrb[0].mxu0
    %v343 = vadd.f32 %v206, %v342
    %v344 = vpop.f32.mrb[0].mxu0
    %v345 = vadd.f32 %v208, %v344
    %v346 = vpop.f32.mrb[0].mxu0
    %v347 = vadd.f32 %v210, %v346
    %348 = vdwg.mxu0
    %v349 = vld [vmem:[%s4] sm:$0xf]
    %v351 = vlaneseq
    %v352 = vshrl.u32 %v351, 7
    %v353 = vsub.s32 0, %v352
    %v354 = vrot.slane %v349, %v353
    %v355 = vlaneseq
    %v356 = vshrl.u32 %v355, 7
    %v357 = vsub.s32 1, %v356
    %v358 = vrot.slane %v349, %v357
    %v359 = vlaneseq
    %v360 = vshrl.u32 %v359, 7
    %v361 = vsub.s32 2, %v360
    %v362 = vrot.slane %v349, %v361
    %v363 = vlaneseq
    %v364 = vshrl.u32 %v363, 7
    %v365 = vsub.s32 3, %v364
    %v366 = vrot.slane %v349, %v365
    %v371 = vadd.f32 %v298, %v354
    %v372 = vadd.f32 %v300, %v358
    %v373 = vadd.f32 %v341, %v362
    %v374 = vadd.f32 %v343, %v366
    %v375 = vadd.f32 %v302, %v354
    %v376 = vadd.f32 %v304, %v358
    %v377 = vadd.f32 %v345, %v362
    %v378 = vadd.f32 %v347, %v366
    %v379 = vmax.f32 %v371, 0.0
    %v380 = vmax.f32 %v372, 0.0
    %v381 = vmax.f32 %v373, 0.0
    %v382 = vmax.f32 %v374, 0.0
    %v383 = vmax.f32 %v375, 0.0
    %v384 = vmax.f32 %v376, 0.0
    %v385 = vmax.f32 %v377, 0.0
    %v386 = vmax.f32 %v378, 0.0
    %v387 = vpack.c.bf16 %v383, %v379
    %v388 = vpack.c.bf16 %v384, %v380
    %v389 = vpack.c.bf16 %v385, %v381
    %v390 = vpack.c.bf16 %v386, %v382
    %v391 = vld [vmem:[#allocation5] sm:$0xff]
    %v392 = vld [vmem:[#allocation5 + $0x8] sm:$0xff]
    %v393 = vld [vmem:[#allocation5 + $0x10] sm:$0xff]
    %v394 = vld [vmem:[#allocation5 + $0x18] sm:$0xff]
    %v395 = vld [vmem:[#allocation5 + $0x20] sm:$0xff]
    %v396 = vld [vmem:[#allocation5 + $0x28] sm:$0xff]
    %v397 = vld [vmem:[#allocation5 + $0x30] sm:$0xff]
    %v398 = vld [vmem:[#allocation5 + $0x38] sm:$0xff]
    %v399 = vld [vmem:[#allocation5 + $0x40] sm:$0xff]
    %v400 = vld [vmem:[#allocation5 + $0x48] sm:$0xff]
    %v401 = vld [vmem:[#allocation5 + $0x50] sm:$0xff]
    %v402 = vld [vmem:[#allocation5 + $0x58] sm:$0xff]
    %v403 = vld [vmem:[#allocation5 + $0x60] sm:$0xff]
    %v404 = vld [vmem:[#allocation5 + $0x68] sm:$0xff]
    %v405 = vld [vmem:[#allocation5 + $0x70] sm:$0xff]
    %v406 = vld [vmem:[#allocation5 + $0x78] sm:$0xff]
    %v407 = vld [vmem:[#allocation5 + $0x80] sm:$0xff]
    %v408 = vld [vmem:[#allocation5 + $0x88] sm:$0xff]
    %v409 = vld [vmem:[#allocation5 + $0x90] sm:$0xff]
    %v410 = vld [vmem:[#allocation5 + $0x98] sm:$0xff]
    %v411 = vld [vmem:[#allocation5 + $0xa0] sm:$0xff]
    %v412 = vld [vmem:[#allocation5 + $0xa8] sm:$0xff]
    %v413 = vld [vmem:[#allocation5 + $0xb0] sm:$0xff]
    %v414 = vld [vmem:[#allocation5 + $0xb8] sm:$0xff]
    %v415 = vld [vmem:[#allocation5 + $0xc0] sm:$0xff]
    %v416 = vld [vmem:[#allocation5 + $0xc8] sm:$0xff]
    %v417 = vld [vmem:[#allocation5 + $0xd0] sm:$0xff]
    %v418 = vld [vmem:[#allocation5 + $0xd8] sm:$0xff]
    %v419 = vld [vmem:[#allocation5 + $0xe0] sm:$0xff]
    %v420 = vld [vmem:[#allocation5 + $0xe8] sm:$0xff]
    %v421 = vld [vmem:[#allocation5 + $0xf0] sm:$0xff]
    %v422 = vld [vmem:[#allocation5 + $0xf8] sm:$0xff]
    %v423 = vld [vmem:[#allocation5 + $0x100] sm:$0xff]
    %v424 = vld [vmem:[#allocation5 + $0x108] sm:$0xff]
    %v425 = vld [vmem:[#allocation5 + $0x110] sm:$0xff]
    %v426 = vld [vmem:[#allocation5 + $0x118] sm:$0xff]
    %v427 = vld [vmem:[#allocation5 + $0x120] sm:$0xff]
    %v428 = vld [vmem:[#allocation5 + $0x128] sm:$0xff]
    %v429 = vld [vmem:[#allocation5 + $0x130] sm:$0xff]
    %v430 = vld [vmem:[#allocation5 + $0x138] sm:$0xff]
    %v431 = vld [vmem:[#allocation5 + $0x140] sm:$0xff]
    %v432 = vld [vmem:[#allocation5 + $0x148] sm:$0xff]
    %v433 = vld [vmem:[#allocation5 + $0x150] sm:$0xff]
    %v434 = vld [vmem:[#allocation5 + $0x158] sm:$0xff]
    %v435 = vld [vmem:[#allocation5 + $0x160] sm:$0xff]
    %v436 = vld [vmem:[#allocation5 + $0x168] sm:$0xff]
    %v437 = vld [vmem:[#allocation5 + $0x170] sm:$0xff]
    %v438 = vld [vmem:[#allocation5 + $0x178] sm:$0xff]
    %v439 = vld [vmem:[#allocation5 + $0x180] sm:$0xff]
    %v440 = vld [vmem:[#allocation5 + $0x188] sm:$0xff]
    %v441 = vld [vmem:[#allocation5 + $0x190] sm:$0xff]
    %v442 = vld [vmem:[#allocation5 + $0x198] sm:$0xff]
    %v443 = vld [vmem:[#allocation5 + $0x1a0] sm:$0xff]
    %v444 = vld [vmem:[#allocation5 + $0x1a8] sm:$0xff]
    %v445 = vld [vmem:[#allocation5 + $0x1b0] sm:$0xff]
    %v446 = vld [vmem:[#allocation5 + $0x1b8] sm:$0xff]
    %v447 = vld [vmem:[#allocation5 + $0x1c0] sm:$0xff]
    %v448 = vld [vmem:[#allocation5 + $0x1c8] sm:$0xff]
    %v449 = vld [vmem:[#allocation5 + $0x1d0] sm:$0xff]
    %v450 = vld [vmem:[#allocation5 + $0x1d8] sm:$0xff]
    %v451 = vld [vmem:[#allocation5 + $0x1e0] sm:$0xff]
    %v452 = vld [vmem:[#allocation5 + $0x1e8] sm:$0xff]
    %v453 = vld [vmem:[#allocation5 + $0x1f0] sm:$0xff]
    %v454 = vld [vmem:[#allocation5 + $0x1f8] sm:$0xff]
    %v455 = vld [vmem:[#allocation5 + $0x200] sm:$0xff]
    %v456 = vld [vmem:[#allocation5 + $0x208] sm:$0xff]
    %v457 = vld [vmem:[#allocation5 + $0x210] sm:$0xff]
    %v458 = vld [vmem:[#allocation5 + $0x218] sm:$0xff]
    %v459 = vld [vmem:[#allocation5 + $0x220] sm:$0xff]
    %v460 = vld [vmem:[#allocation5 + $0x228] sm:$0xff]
    %v461 = vld [vmem:[#allocation5 + $0x230] sm:$0xff]
    %v462 = vld [vmem:[#allocation5 + $0x238] sm:$0xff]
    %v463 = vld [vmem:[#allocation5 + $0x240] sm:$0xff]
    %v464 = vld [vmem:[#allocation5 + $0x248] sm:$0xff]
    %v465 = vld [vmem:[#allocation5 + $0x250] sm:$0xff]
    %v466 = vld [vmem:[#allocation5 + $0x258] sm:$0xff]
    %v467 = vld [vmem:[#allocation5 + $0x260] sm:$0xff]
    %v468 = vld [vmem:[#allocation5 + $0x268] sm:$0xff]
    %v469 = vld [vmem:[#allocation5 + $0x270] sm:$0xff]
    %v470 = vld [vmem:[#allocation5 + $0x278] sm:$0xff]
    %v471 = vld [vmem:[#allocation5 + $0x280] sm:$0xff]
    %v472 = vld [vmem:[#allocation5 + $0x288] sm:$0xff]
    %v473 = vld [vmem:[#allocation5 + $0x290] sm:$0xff]
    %v474 = vld [vmem:[#allocation5 + $0x298] sm:$0xff]
    %v475 = vld [vmem:[#allocation5 + $0x2a0] sm:$0xff]
    %v476 = vld [vmem:[#allocation5 + $0x2a8] sm:$0xff]
    %v477 = vld [vmem:[#allocation5 + $0x2b0] sm:$0xff]
    %v478 = vld [vmem:[#allocation5 + $0x2b8] sm:$0xff]
    %v479 = vld [vmem:[#allocation5 + $0x2c0] sm:$0xff]
    %v480 = vld [vmem:[#allocation5 + $0x2c8] sm:$0xff]
    %v481 = vld [vmem:[#allocation5 + $0x2d0] sm:$0xff]
    %v482 = vld [vmem:[#allocation5 + $0x2d8] sm:$0xff]
    %v483 = vld [vmem:[#allocation5 + $0x2e0] sm:$0xff]
    %v484 = vld [vmem:[#allocation5 + $0x2e8] sm:$0xff]
    %v485 = vld [vmem:[#allocation5 + $0x2f0] sm:$0xff]
    %v486 = vld [vmem:[#allocation5 + $0x2f8] sm:$0xff]
    %v487 = vld [vmem:[#allocation5 + $0x300] sm:$0xff]
    %v488 = vld [vmem:[#allocation5 + $0x308] sm:$0xff]
    %v489 = vld [vmem:[#allocation5 + $0x310] sm:$0xff]
    %v490 = vld [vmem:[#allocation5 + $0x318] sm:$0xff]
    %v491 = vld [vmem:[#allocation5 + $0x320] sm:$0xff]
    %v492 = vld [vmem:[#allocation5 + $0x328] sm:$0xff]
    %v493 = vld [vmem:[#allocation5 + $0x330] sm:$0xff]
    %v494 = vld [vmem:[#allocation5 + $0x338] sm:$0xff]
    %v495 = vld [vmem:[#allocation5 + $0x340] sm:$0xff]
    %v496 = vld [vmem:[#allocation5 + $0x348] sm:$0xff]
    %v497 = vld [vmem:[#allocation5 + $0x350] sm:$0xff]
    %v498 = vld [vmem:[#allocation5 + $0x358] sm:$0xff]
    %v499 = vld [vmem:[#allocation5 + $0x360] sm:$0xff]
    %v500 = vld [vmem:[#allocation5 + $0x368] sm:$0xff]
    %v501 = vld [vmem:[#allocation5 + $0x370] sm:$0xff]
    %v502 = vld [vmem:[#allocation5 + $0x378] sm:$0xff]
    %v503 = vld [vmem:[#allocation5 + $0x380] sm:$0xff]
    %v504 = vld [vmem:[#allocation5 + $0x388] sm:$0xff]
    %v505 = vld [vmem:[#allocation5 + $0x390] sm:$0xff]
    %v506 = vld [vmem:[#allocation5 + $0x398] sm:$0xff]
    %v507 = vld [vmem:[#allocation5 + $0x3a0] sm:$0xff]
    %v508 = vld [vmem:[#allocation5 + $0x3a8] sm:$0xff]
    %v509 = vld [vmem:[#allocation5 + $0x3b0] sm:$0xff]
    %v510 = vld [vmem:[#allocation5 + $0x3b8] sm:$0xff]
    %v511 = vld [vmem:[#allocation5 + $0x3c0] sm:$0xff]
    %v512 = vld [vmem:[#allocation5 + $0x3c8] sm:$0xff]
    %v513 = vld [vmem:[#allocation5 + $0x3d0] sm:$0xff]
    %v514 = vld [vmem:[#allocation5 + $0x3d8] sm:$0xff]
    %v515 = vld [vmem:[#allocation5 + $0x3e0] sm:$0xff]
    %v516 = vld [vmem:[#allocation5 + $0x3e8] sm:$0xff]
    %v517 = vld [vmem:[#allocation5 + $0x3f0] sm:$0xff]
    %v518 = vld [vmem:[#allocation5 + $0x3f8] sm:$0xff]
    %v519 = vld [vmem:[%s6] sm:$0xf]
    %v521 = vlaneseq
    %v522 = vshrl.u32 %v521, 7
    %v523 = vsub.s32 0, %v522
    %v524 = vrot.slane %v519, %v523
    %v525 = vlaneseq
    %v526 = vshrl.u32 %v525, 7
    %v527 = vsub.s32 1, %v526
    %v528 = vrot.slane %v519, %v527
    %v529 = vlaneseq
    %v530 = vshrl.u32 %v529, 7
    %v531 = vsub.s32 2, %v530
    %v532 = vrot.slane %v519, %v531
    %v533 = vlaneseq
    %v534 = vshrl.u32 %v533, 7
    %v535 = vsub.s32 3, %v534
    %v536 = vrot.slane %v519, %v535
    %v669 = vunpack.c.l.b16 %v391
    %v670 = vunpack.c.h.b16 %v391
    %v671 = vunpack.c.l.b16 %v392
    %v672 = vunpack.c.h.b16 %v392
    %v673 = vunpack.c.l.b16 %v393
    %v674 = vunpack.c.h.b16 %v393
    %v675 = vunpack.c.l.b16 %v394
    %v676 = vunpack.c.h.b16 %v394
    %v677 = vunpack.c.l.b16 %v395
    %v678 = vunpack.c.h.b16 %v395
    %v679 = vunpack.c.l.b16 %v396
    %v680 = vunpack.c.h.b16 %v396
    %v681 = vunpack.c.l.b16 %v397
    %v682 = vunpack.c.h.b16 %v397
    %v683 = vunpack.c.l.b16 %v398
    %v684 = vunpack.c.h.b16 %v398
    %v685 = vunpack.c.l.b16 %v399
    %v686 = vunpack.c.h.b16 %v399
    %v687 = vunpack.c.l.b16 %v400
    %v688 = vunpack.c.h.b16 %v400
    %v689 = vunpack.c.l.b16 %v401
    %v690 = vunpack.c.h.b16 %v401
    %v691 = vunpack.c.l.b16 %v402
    %v692 = vunpack.c.h.b16 %v402
    %v693 = vunpack.c.l.b16 %v403
    %v694 = vunpack.c.h.b16 %v403
    %v695 = vunpack.c.l.b16 %v404
    %v696 = vunpack.c.h.b16 %v404
    %v697 = vunpack.c.l.b16 %v405
    %v698 = vunpack.c.h.b16 %v405
    %v699 = vunpack.c.l.b16 %v406
    %v700 = vunpack.c.h.b16 %v406
    %v701 = vunpack.c.l.b16 %v407
    %v702 = vunpack.c.h.b16 %v407
    %v703 = vunpack.c.l.b16 %v408
    %v704 = vunpack.c.h.b16 %v408
    %v705 = vunpack.c.l.b16 %v409
    %v706 = vunpack.c.h.b16 %v409
    %v707 = vunpack.c.l.b16 %v410
    %v708 = vunpack.c.h.b16 %v410
    %v709 = vunpack.c.l.b16 %v411
    %v710 = vunpack.c.h.b16 %v411
    %v711 = vunpack.c.l.b16 %v412
    %v712 = vunpack.c.h.b16 %v412
    %v713 = vunpack.c.l.b16 %v413
    %v714 = vunpack.c.h.b16 %v413
    %v715 = vunpack.c.l.b16 %v414
    %v716 = vunpack.c.h.b16 %v414
    %v717 = vunpack.c.l.b16 %v415
    %v718 = vunpack.c.h.b16 %v415
    %v719 = vunpack.c.l.b16 %v416
    %v720 = vunpack.c.h.b16 %v416
    %v721 = vunpack.c.l.b16 %v417
    %v722 = vunpack.c.h.b16 %v417
    %v723 = vunpack.c.l.b16 %v418
    %v724 = vunpack.c.h.b16 %v418
    %v725 = vunpack.c.l.b16 %v419
    %v726 = vunpack.c.h.b16 %v419
    %v727 = vunpack.c.l.b16 %v420
    %v728 = vunpack.c.h.b16 %v420
    %v729 = vunpack.c.l.b16 %v421
    %v730 = vunpack.c.h.b16 %v421
    %v731 = vunpack.c.l.b16 %v422
    %v732 = vunpack.c.h.b16 %v422
    %v733 = vunpack.c.l.b16 %v423
    %v734 = vunpack.c.h.b16 %v423
    %v735 = vunpack.c.l.b16 %v424
    %v736 = vunpack.c.h.b16 %v424
    %v737 = vunpack.c.l.b16 %v425
    %v738 = vunpack.c.h.b16 %v425
    %v739 = vunpack.c.l.b16 %v426
    %v740 = vunpack.c.h.b16 %v426
    %v741 = vunpack.c.l.b16 %v427
    %v742 = vunpack.c.h.b16 %v427
    %v743 = vunpack.c.l.b16 %v428
    %v744 = vunpack.c.h.b16 %v428
    %v745 = vunpack.c.l.b16 %v429
    %v746 = vunpack.c.h.b16 %v429
    %v747 = vunpack.c.l.b16 %v430
    %v748 = vunpack.c.h.b16 %v430
    %v749 = vunpack.c.l.b16 %v431
    %v750 = vunpack.c.h.b16 %v431
    %v751 = vunpack.c.l.b16 %v432
    %v752 = vunpack.c.h.b16 %v432
    %v753 = vunpack.c.l.b16 %v433
    %v754 = vunpack.c.h.b16 %v433
    %v755 = vunpack.c.l.b16 %v434
    %v756 = vunpack.c.h.b16 %v434
    %v757 = vunpack.c.l.b16 %v435
    %v758 = vunpack.c.h.b16 %v435
    %v759 = vunpack.c.l.b16 %v436
    %v760 = vunpack.c.h.b16 %v436
    %v761 = vunpack.c.l.b16 %v437
    %v762 = vunpack.c.h.b16 %v437
    %v763 = vunpack.c.l.b16 %v438
    %v764 = vunpack.c.h.b16 %v438
    %v765 = vunpack.c.l.b16 %v439
    %v766 = vunpack.c.h.b16 %v439
    %v767 = vunpack.c.l.b16 %v440
    %v768 = vunpack.c.h.b16 %v440
    %v769 = vunpack.c.l.b16 %v441
    %v770 = vunpack.c.h.b16 %v441
    %v771 = vunpack.c.l.b16 %v442
    %v772 = vunpack.c.h.b16 %v442
    %v773 = vunpack.c.l.b16 %v443
    %v774 = vunpack.c.h.b16 %v443
    %v775 = vunpack.c.l.b16 %v444
    %v776 = vunpack.c.h.b16 %v444
    %v777 = vunpack.c.l.b16 %v445
    %v778 = vunpack.c.h.b16 %v445
    %v779 = vunpack.c.l.b16 %v446
    %v780 = vunpack.c.h.b16 %v446
    %v781 = vunpack.c.l.b16 %v447
    %v782 = vunpack.c.h.b16 %v447
    %v783 = vunpack.c.l.b16 %v448
    %v784 = vunpack.c.h.b16 %v448
    %v785 = vunpack.c.l.b16 %v449
    %v786 = vunpack.c.h.b16 %v449
    %v787 = vunpack.c.l.b16 %v450
    %v788 = vunpack.c.h.b16 %v450
    %v789 = vunpack.c.l.b16 %v451
    %v790 = vunpack.c.h.b16 %v451
    %v791 = vunpack.c.l.b16 %v452
    %v792 = vunpack.c.h.b16 %v452
    %v793 = vunpack.c.l.b16 %v453
    %v794 = vunpack.c.h.b16 %v453
    %v795 = vunpack.c.l.b16 %v454
    %v796 = vunpack.c.h.b16 %v454
    %v797 = vunpack.c.l.b16 %v455
    %v798 = vunpack.c.h.b16 %v455
    %v799 = vunpack.c.l.b16 %v456
    %v800 = vunpack.c.h.b16 %v456
    %v801 = vunpack.c.l.b16 %v457
    %v802 = vunpack.c.h.b16 %v457
    %v803 = vunpack.c.l.b16 %v458
    %v804 = vunpack.c.h.b16 %v458
    %v805 = vunpack.c.l.b16 %v459
    %v806 = vunpack.c.h.b16 %v459
    %v807 = vunpack.c.l.b16 %v460
    %v808 = vunpack.c.h.b16 %v460
    %v809 = vunpack.c.l.b16 %v461
    %v810 = vunpack.c.h.b16 %v461
    %v811 = vunpack.c.l.b16 %v462
    %v812 = vunpack.c.h.b16 %v462
    %v813 = vunpack.c.l.b16 %v463
    %v814 = vunpack.c.h.b16 %v463
    %v815 = vunpack.c.l.b16 %v464
    %v816 = vunpack.c.h.b16 %v464
    %v817 = vunpack.c.l.b16 %v465
    %v818 = vunpack.c.h.b16 %v465
    %v819 = vunpack.c.l.b16 %v466
    %v820 = vunpack.c.h.b16 %v466
    %v821 = vunpack.c.l.b16 %v467
    %v822 = vunpack.c.h.b16 %v467
    %v823 = vunpack.c.l.b16 %v468
    %v824 = vunpack.c.h.b16 %v468
    %v825 = vunpack.c.l.b16 %v469
    %v826 = vunpack.c.h.b16 %v469
    %v827 = vunpack.c.l.b16 %v470
    %v828 = vunpack.c.h.b16 %v470
    %v829 = vunpack.c.l.b16 %v471
    %v830 = vunpack.c.h.b16 %v471
    %v831 = vunpack.c.l.b16 %v472
    %v832 = vunpack.c.h.b16 %v472
    %v833 = vunpack.c.l.b16 %v473
    %v834 = vunpack.c.h.b16 %v473
    %v835 = vunpack.c.l.b16 %v474
    %v836 = vunpack.c.h.b16 %v474
    %v837 = vunpack.c.l.b16 %v475
    %v838 = vunpack.c.h.b16 %v475
    %v839 = vunpack.c.l.b16 %v476
    %v840 = vunpack.c.h.b16 %v476
    %v841 = vunpack.c.l.b16 %v477
    %v842 = vunpack.c.h.b16 %v477
    %v843 = vunpack.c.l.b16 %v478
    %v844 = vunpack.c.h.b16 %v478
    %v845 = vunpack.c.l.b16 %v479
    %v846 = vunpack.c.h.b16 %v479
    %v847 = vunpack.c.l.b16 %v480
    %v848 = vunpack.c.h.b16 %v480
    %v849 = vunpack.c.l.b16 %v481
    %v850 = vunpack.c.h.b16 %v481
    %v851 = vunpack.c.l.b16 %v482
    %v852 = vunpack.c.h.b16 %v482
    %v853 = vunpack.c.l.b16 %v483
    %v854 = vunpack.c.h.b16 %v483
    %v855 = vunpack.c.l.b16 %v484
    %v856 = vunpack.c.h.b16 %v484
    %v857 = vunpack.c.l.b16 %v485
    %v858 = vunpack.c.h.b16 %v485
    %v859 = vunpack.c.l.b16 %v486
    %v860 = vunpack.c.h.b16 %v486
    %v861 = vunpack.c.l.b16 %v487
    %v862 = vunpack.c.h.b16 %v487
    %v863 = vunpack.c.l.b16 %v488
    %v864 = vunpack.c.h.b16 %v488
    %v865 = vunpack.c.l.b16 %v489
    %v866 = vunpack.c.h.b16 %v489
    %v867 = vunpack.c.l.b16 %v490
    %v868 = vunpack.c.h.b16 %v490
    %v869 = vunpack.c.l.b16 %v491
    %v870 = vunpack.c.h.b16 %v491
    %v871 = vunpack.c.l.b16 %v492
    %v872 = vunpack.c.h.b16 %v492
    %v873 = vunpack.c.l.b16 %v493
    %v874 = vunpack.c.h.b16 %v493
    %v875 = vunpack.c.l.b16 %v494
    %v876 = vunpack.c.h.b16 %v494
    %v877 = vunpack.c.l.b16 %v495
    %v878 = vunpack.c.h.b16 %v495
    %v879 = vunpack.c.l.b16 %v496
    %v880 = vunpack.c.h.b16 %v496
    %v881 = vunpack.c.l.b16 %v497
    %v882 = vunpack.c.h.b16 %v497
    %v883 = vunpack.c.l.b16 %v498
    %v884 = vunpack.c.h.b16 %v498
    %v885 = vunpack.c.l.b16 %v499
    %v886 = vunpack.c.h.b16 %v499
    %v887 = vunpack.c.l.b16 %v500
    %v888 = vunpack.c.h.b16 %v500
    %v889 = vunpack.c.l.b16 %v501
    %v890 = vunpack.c.h.b16 %v501
    %v891 = vunpack.c.l.b16 %v502
    %v892 = vunpack.c.h.b16 %v502
    %v893 = vunpack.c.l.b16 %v503
    %v894 = vunpack.c.h.b16 %v503
    %v895 = vunpack.c.l.b16 %v504
    %v896 = vunpack.c.h.b16 %v504
    %v897 = vunpack.c.l.b16 %v505
    %v898 = vunpack.c.h.b16 %v505
    %v899 = vunpack.c.l.b16 %v506
    %v900 = vunpack.c.h.b16 %v506
    %v901 = vunpack.c.l.b16 %v507
    %v902 = vunpack.c.h.b16 %v507
    %v903 = vunpack.c.l.b16 %v508
    %v904 = vunpack.c.h.b16 %v508
    %v905 = vunpack.c.l.b16 %v509
    %v906 = vunpack.c.h.b16 %v509
    %v907 = vunpack.c.l.b16 %v510
    %v908 = vunpack.c.h.b16 %v510
    %v909 = vunpack.c.l.b16 %v511
    %v910 = vunpack.c.h.b16 %v511
    %v911 = vunpack.c.l.b16 %v512
    %v912 = vunpack.c.h.b16 %v512
    %v913 = vunpack.c.l.b16 %v513
    %v914 = vunpack.c.h.b16 %v513
    %v915 = vunpack.c.l.b16 %v514
    %v916 = vunpack.c.h.b16 %v514
    %v917 = vunpack.c.l.b16 %v515
    %v918 = vunpack.c.h.b16 %v515
    %v919 = vunpack.c.l.b16 %v516
    %v920 = vunpack.c.h.b16 %v516
    %v921 = vunpack.c.l.b16 %v517
    %v922 = vunpack.c.h.b16 %v517
    %v923 = vunpack.c.l.b16 %v518
    %v924 = vunpack.c.h.b16 %v518
    %v925 = vpack.c.b16 %v673, %v669
    %v926 = vpack.c.b16 %v674, %v670
    %v927 = vpack.c.b16 %v675, %v671
    %v928 = vpack.c.b16 %v676, %v672
    %v929 = vpack.c.b16 %v681, %v677
    %v930 = vpack.c.b16 %v682, %v678
    %v931 = vpack.c.b16 %v683, %v679
    %v932 = vpack.c.b16 %v684, %v680
    %v933 = vpack.c.b16 %v689, %v685
    %v934 = vpack.c.b16 %v690, %v686
    %v935 = vpack.c.b16 %v691, %v687
    %v936 = vpack.c.b16 %v692, %v688
    %v937 = vpack.c.b16 %v697, %v693
    %v938 = vpack.c.b16 %v698, %v694
    %v939 = vpack.c.b16 %v699, %v695
    %v940 = vpack.c.b16 %v700, %v696
    %v941 = vpack.c.b16 %v705, %v701
    %v942 = vpack.c.b16 %v706, %v702
    %v943 = vpack.c.b16 %v707, %v703
    %v944 = vpack.c.b16 %v708, %v704
    %v945 = vpack.c.b16 %v713, %v709
    %v946 = vpack.c.b16 %v714, %v710
    %v947 = vpack.c.b16 %v715, %v711
    %v948 = vpack.c.b16 %v716, %v712
    %v949 = vpack.c.b16 %v721, %v717
    %v950 = vpack.c.b16 %v722, %v718
    %v951 = vpack.c.b16 %v723, %v719
    %v952 = vpack.c.b16 %v724, %v720
    %v953 = vpack.c.b16 %v729, %v725
    %v954 = vpack.c.b16 %v730, %v726
    %v955 = vpack.c.b16 %v731, %v727
    %v956 = vpack.c.b16 %v732, %v728
    %v957 = vpack.c.b16 %v737, %v733
    %v958 = vpack.c.b16 %v738, %v734
    %v959 = vpack.c.b16 %v739, %v735
    %v960 = vpack.c.b16 %v740, %v736
    %v961 = vpack.c.b16 %v745, %v741
    %v962 = vpack.c.b16 %v746, %v742
    %v963 = vpack.c.b16 %v747, %v743
    %v964 = vpack.c.b16 %v748, %v744
    %v965 = vpack.c.b16 %v753, %v749
    %v966 = vpack.c.b16 %v754, %v750
    %v967 = vpack.c.b16 %v755, %v751
    %v968 = vpack.c.b16 %v756, %v752
    %v969 = vpack.c.b16 %v761, %v757
    %v970 = vpack.c.b16 %v762, %v758
    %v971 = vpack.c.b16 %v763, %v759
    %v972 = vpack.c.b16 %v764, %v760
    %v973 = vpack.c.b16 %v769, %v765
    %v974 = vpack.c.b16 %v770, %v766
    %v975 = vpack.c.b16 %v771, %v767
    %v976 = vpack.c.b16 %v772, %v768
    %v977 = vpack.c.b16 %v777, %v773
    %v978 = vpack.c.b16 %v778, %v774
    %v979 = vpack.c.b16 %v779, %v775
    %v980 = vpack.c.b16 %v780, %v776
    %v981 = vpack.c.b16 %v785, %v781
    %v982 = vpack.c.b16 %v786, %v782
    %v983 = vpack.c.b16 %v787, %v783
    %v984 = vpack.c.b16 %v788, %v784
    %v985 = vpack.c.b16 %v793, %v789
    %v986 = vpack.c.b16 %v794, %v790
    %v987 = vpack.c.b16 %v795, %v791
    %v988 = vpack.c.b16 %v796, %v792
    %v989 = vpack.c.b16 %v801, %v797
    %v990 = vpack.c.b16 %v802, %v798
    %v991 = vpack.c.b16 %v803, %v799
    %v992 = vpack.c.b16 %v804, %v800
    %v993 = vpack.c.b16 %v809, %v805
    %v994 = vpack.c.b16 %v810, %v806
    %v995 = vpack.c.b16 %v811, %v807
    %v996 = vpack.c.b16 %v812, %v808
    %v997 = vpack.c.b16 %v817, %v813
    %v998 = vpack.c.b16 %v818, %v814
    %v999 = vpack.c.b16 %v819, %v815
    %v1000 = vpack.c.b16 %v820, %v816
    %v1001 = vpack.c.b16 %v825, %v821
    %v1002 = vpack.c.b16 %v826, %v822
    %v1003 = vpack.c.b16 %v827, %v823
    %v1004 = vpack.c.b16 %v828, %v824
    %v1005 = vpack.c.b16 %v833, %v829
    %v1006 = vpack.c.b16 %v834, %v830
    %v1007 = vpack.c.b16 %v835, %v831
    %v1008 = vpack.c.b16 %v836, %v832
    %v1009 = vpack.c.b16 %v841, %v837
    %v1010 = vpack.c.b16 %v842, %v838
    %v1011 = vpack.c.b16 %v843, %v839
    %v1012 = vpack.c.b16 %v844, %v840
    %v1013 = vpack.c.b16 %v849, %v845
    %v1014 = vpack.c.b16 %v850, %v846
    %v1015 = vpack.c.b16 %v851, %v847
    %v1016 = vpack.c.b16 %v852, %v848
    %v1017 = vpack.c.b16 %v857, %v853
    %v1018 = vpack.c.b16 %v858, %v854
    %v1019 = vpack.c.b16 %v859, %v855
    %v1020 = vpack.c.b16 %v860, %v856
    %v1021 = vpack.c.b16 %v865, %v861
    %v1022 = vpack.c.b16 %v866, %v862
    %v1023 = vpack.c.b16 %v867, %v863
    %v1024 = vpack.c.b16 %v868, %v864
    %v1025 = vpack.c.b16 %v873, %v869
    %v1026 = vpack.c.b16 %v874, %v870
    %v1027 = vpack.c.b16 %v875, %v871
    %v1028 = vpack.c.b16 %v876, %v872
    %v1029 = vpack.c.b16 %v881, %v877
    %v1030 = vpack.c.b16 %v882, %v878
    %v1031 = vpack.c.b16 %v883, %v879
    %v1032 = vpack.c.b16 %v884, %v880
    %v1033 = vpack.c.b16 %v889, %v885
    %v1034 = vpack.c.b16 %v890, %v886
    %v1035 = vpack.c.b16 %v891, %v887
    %v1036 = vpack.c.b16 %v892, %v888
    %v1037 = vpack.c.b16 %v897, %v893
    %v1038 = vpack.c.b16 %v898, %v894
    %v1039 = vpack.c.b16 %v899, %v895
    %v1040 = vpack.c.b16 %v900, %v896
    %v1041 = vpack.c.b16 %v905, %v901
    %v1042 = vpack.c.b16 %v906, %v902
    %v1043 = vpack.c.b16 %v907, %v903
    %v1044 = vpack.c.b16 %v908, %v904
    %v1045 = vpack.c.b16 %v913, %v909
    %v1046 = vpack.c.b16 %v914, %v910
    %v1047 = vpack.c.b16 %v915, %v911
    %v1048 = vpack.c.b16 %v916, %v912
    %v1049 = vpack.c.b16 %v921, %v917
    %v1050 = vpack.c.b16 %v922, %v918
    %v1051 = vpack.c.b16 %v923, %v919
    %v1052 = vpack.c.b16 %v924, %v920
    %1181 = vmatprep.subr.bf16.mxu0 %v926
    %1182 = vmatpush1.bf16.msra.mxu0 %v925
    %1183 = vmatprep.subr.bf16.mxu0 %v930
    %1184 = vmatpush1.bf16.msra.mxu0 %v929
    %1185 = vmatprep.subr.bf16.mxu0 %v934
    %1186 = vmatpush1.bf16.msra.mxu0 %v933
    %1187 = vmatprep.subr.bf16.mxu0 %v938
    %1188 = vmatpush1.bf16.msra.mxu0 %v937
    %1189 = vmatprep.subr.bf16.mxu0 %v942
    %1190 = vmatpush1.bf16.msra.mxu0 %v941
    %1191 = vmatprep.subr.bf16.mxu0 %v946
    %1192 = vmatpush1.bf16.msra.mxu0 %v945
    %1193 = vmatprep.subr.bf16.mxu0 %v950
    %1194 = vmatpush1.bf16.msra.mxu0 %v949
    %1195 = vmatprep.subr.bf16.mxu0 %v954
    %1196 = vmatpush1.bf16.msra.mxu0 %v953
    %1197 = vmatprep.subr.bf16.mxu0 %v958
    %1198 = vmatpush1.bf16.msra.mxu0 %v957
    %1199 = vmatprep.subr.bf16.mxu0 %v962
    %1200 = vmatpush1.bf16.msra.mxu0 %v961
    %1201 = vmatprep.subr.bf16.mxu0 %v966
    %1202 = vmatpush1.bf16.msra.mxu0 %v965
    %1203 = vmatprep.subr.bf16.mxu0 %v970
    %1204 = vmatpush1.bf16.msra.mxu0 %v969
    %1205 = vmatprep.subr.bf16.mxu0 %v974
    %1206 = vmatpush1.bf16.msra.mxu0 %v973
    %1207 = vmatprep.subr.bf16.mxu0 %v978
    %1208 = vmatpush1.bf16.msra.mxu0 %v977
    %1209 = vmatprep.subr.bf16.mxu0 %v982
    %1210 = vmatpush1.bf16.msra.mxu0 %v981
    %1211 = vmatprep.subr.bf16.mxu0 %v986
    %1212 = vmatpush1.bf16.msra.mxu0 %v985
    %1213 = vmatprep.mubr.bf16.mxu0 %v388
    %1214 = vmatmul.mubr.bf16.gmra.mrb[0].mxu0 %v387
    %v1215 = vpop.f32.mrb[0].mxu0
    %v1216 = vadd.f32 %v524, %v1215
    %v1217 = vpop.f32.mrb[0].mxu0
    %v1218 = vadd.f32 %v528, %v1217
    %v1219 = vpop.f32.mrb[0].mxu0
    %v1220 = vadd.f32 %v524, %v1219
    %v1221 = vpop.f32.mrb[0].mxu0
    %v1222 = vadd.f32 %v528, %v1221
    %1223 = vdwg.mxu0
    %1224 = vmatprep.subr.bf16.mxu0 %v990
    %1225 = vmatpush1.bf16.msra.mxu0 %v989
    %1226 = vmatprep.subr.bf16.mxu0 %v994
    %1227 = vmatpush1.bf16.msra.mxu0 %v993
    %1228 = vmatprep.subr.bf16.mxu0 %v998
    %1229 = vmatpush1.bf16.msra.mxu0 %v997
    %1230 = vmatprep.subr.bf16.mxu0 %v1002
    %1231 = vmatpush1.bf16.msra.mxu0 %v1001
    %1232 = vmatprep.subr.bf16.mxu0 %v1006
    %1233 = vmatpush1.bf16.msra.mxu0 %v1005
    %1234 = vmatprep.subr.bf16.mxu0 %v1010
    %1235 = vmatpush1.bf16.msra.mxu0 %v1009
    %1236 = vmatprep.subr.bf16.mxu0 %v1014
    %1237 = vmatpush1.bf16.msra.mxu0 %v1013
    %1238 = vmatprep.subr.bf16.mxu0 %v1018
    %1239 = vmatpush1.bf16.msra.mxu0 %v1017
    %1240 = vmatprep.subr.bf16.mxu0 %v1022
    %1241 = vmatpush1.bf16.msra.mxu0 %v1021
    %1242 = vmatprep.subr.bf16.mxu0 %v1026
    %1243 = vmatpush1.bf16.msra.mxu0 %v1025
    %1244 = vmatprep.subr.bf16.mxu0 %v1030
    %1245 = vmatpush1.bf16.msra.mxu0 %v1029
    %1246 = vmatprep.subr.bf16.mxu0 %v1034
    %1247 = vmatpush1.bf16.msra.mxu0 %v1033
    %1248 = vmatprep.subr.bf16.mxu0 %v1038
    %1249 = vmatpush1.bf16.msra.mxu0 %v1037
    %1250 = vmatprep.subr.bf16.mxu0 %v1042
    %1251 = vmatpush1.bf16.msra.mxu0 %v1041
    %1252 = vmatprep.subr.bf16.mxu0 %v1046
    %1253 = vmatpush1.bf16.msra.mxu0 %v1045
    %1254 = vmatprep.subr.bf16.mxu0 %v1050
    %1255 = vmatpush1.bf16.msra.mxu0 %v1049
    %1256 = vmatprep.mubr.bf16.mxu0 %v390
    %1257 = vmatmul.mubr.bf16.gmra.mrb[0].mxu0 %v389
    %v1258 = vpop.f32.mrb[0].mxu0
    %v1259 = vadd.f32 %v1216, %v1258
    %v1260 = vpop.f32.mrb[0].mxu0
    %v1261 = vadd.f32 %v1218, %v1260
    %v1262 = vpop.f32.mrb[0].mxu0
    %v1263 = vadd.f32 %v1220, %v1262
    %v1264 = vpop.f32.mrb[0].mxu0
    %v1265 = vadd.f32 %v1222, %v1264
    %1266 = vdwg.mxu0
    %1267 = vmatprep.subr.bf16.mxu0 %v928
    %1268 = vmatpush1.bf16.msra.mxu0 %v927
    %1269 = vmatprep.subr.bf16.mxu0 %v932
    %1270 = vmatpush1.bf16.msra.mxu0 %v931
    %1271 = vmatprep.subr.bf16.mxu0 %v936
    %1272 = vmatpush1.bf16.msra.mxu0 %v935
    %1273 = vmatprep.subr.bf16.mxu0 %v940
    %1274 = vmatpush1.bf16.msra.mxu0 %v939
    %1275 = vmatprep.subr.bf16.mxu0 %v944
    %1276 = vmatpush1.bf16.msra.mxu0 %v943
    %1277 = vmatprep.subr.bf16.mxu0 %v948
    %1278 = vmatpush1.bf16.msra.mxu0 %v947
    %1279 = vmatprep.subr.bf16.mxu0 %v952
    %1280 = vmatpush1.bf16.msra.mxu0 %v951
    %1281 = vmatprep.subr.bf16.mxu0 %v956
    %1282 = vmatpush1.bf16.msra.mxu0 %v955
    %1283 = vmatprep.subr.bf16.mxu0 %v960
    %1284 = vmatpush1.bf16.msra.mxu0 %v959
    %1285 = vmatprep.subr.bf16.mxu0 %v964
    %1286 = vmatpush1.bf16.msra.mxu0 %v963
    %1287 = vmatprep.subr.bf16.mxu0 %v968
    %1288 = vmatpush1.bf16.msra.mxu0 %v967
    %1289 = vmatprep.subr.bf16.mxu0 %v972
    %1290 = vmatpush1.bf16.msra.mxu0 %v971
    %1291 = vmatprep.subr.bf16.mxu0 %v976
    %1292 = vmatpush1.bf16.msra.mxu0 %v975
    %1293 = vmatprep.subr.bf16.mxu0 %v980
    %1294 = vmatpush1.bf16.msra.mxu0 %v979
    %1295 = vmatprep.subr.bf16.mxu0 %v984
    %1296 = vmatpush1.bf16.msra.mxu0 %v983
    %1297 = vmatprep.subr.bf16.mxu0 %v988
    %1298 = vmatpush1.bf16.msra.mxu0 %v987
    %1299 = vmatprep.mubr.bf16.mxu0 %v388
    %1300 = vmatmul.mubr.bf16.gmra.mrb[0].mxu0 %v387
    %v1301 = vpop.f32.mrb[0].mxu0
    %v1302 = vadd.f32 %v532, %v1301
    %v1303 = vpop.f32.mrb[0].mxu0
    %v1304 = vadd.f32 %v536, %v1303
    %v1305 = vpop.f32.mrb[0].mxu0
    %v1306 = vadd.f32 %v532, %v1305
    %v1307 = vpop.f32.mrb[0].mxu0
    %v1308 = vadd.f32 %v536, %v1307
    %1309 = vdwg.mxu0
    %1310 = vmatprep.subr.bf16.mxu0 %v992
    %1311 = vmatpush1.bf16.msra.mxu0 %v991
    %1312 = vmatprep.subr.bf16.mxu0 %v996
    %1313 = vmatpush1.bf16.msra.mxu0 %v995
    %1314 = vmatprep.subr.bf16.mxu0 %v1000
    %1315 = vmatpush1.bf16.msra.mxu0 %v999
    %1316 = vmatprep.subr.bf16.mxu0 %v1004
    %1317 = vmatpush1.bf16.msra.mxu0 %v1003
    %1318 = vmatprep.subr.bf16.mxu0 %v1008
    %1319 = vmatpush1.bf16.msra.mxu0 %v1007
    %1320 = vmatprep.subr.bf16.mxu0 %v1012
    %1321 = vmatpush1.bf16.msra.mxu0 %v1011
    %1322 = vmatprep.subr.bf16.mxu0 %v1016
    %1323 = vmatpush1.bf16.msra.mxu0 %v1015
    %1324 = vmatprep.subr.bf16.mxu0 %v1020
    %1325 = vmatpush1.bf16.msra.mxu0 %v1019
    %1326 = vmatprep.subr.bf16.mxu0 %v1024
    %1327 = vmatpush1.bf16.msra.mxu0 %v1023
    %1328 = vmatprep.subr.bf16.mxu0 %v1028
    %1329 = vmatpush1.bf16.msra.mxu0 %v1027
    %1330 = vmatprep.subr.bf16.mxu0 %v1032
    %1331 = vmatpush1.bf16.msra.mxu0 %v1031
    %1332 = vmatprep.subr.bf16.mxu0 %v1036
    %1333 = vmatpush1.bf16.msra.mxu0 %v1035
    %1334 = vmatprep.subr.bf16.mxu0 %v1040
    %1335 = vmatpush1.bf16.msra.mxu0 %v1039
    %1336 = vmatprep.subr.bf16.mxu0 %v1044
    %1337 = vmatpush1.bf16.msra.mxu0 %v1043
    %1338 = vmatprep.subr.bf16.mxu0 %v1048
    %1339 = vmatpush1.bf16.msra.mxu0 %v1047
    %1340 = vmatprep.subr.bf16.mxu0 %v1052
    %1341 = vmatpush1.bf16.msra.mxu0 %v1051
    %1342 = vmatprep.mubr.bf16.mxu0 %v390
    %1343 = vmatmul.mubr.bf16.gmra.mrb[0].mxu0 %v389
    %v1344 = vpop.f32.mrb[0].mxu0
    %v1345 = vadd.f32 %v1302, %v1344
    %v1346 = vpop.f32.mrb[0].mxu0
    %v1347 = vadd.f32 %v1304, %v1346
    %v1348 = vpop.f32.mrb[0].mxu0
    %v1349 = vadd.f32 %v1306, %v1348
    %v1350 = vpop.f32.mrb[0].mxu0
    %v1351 = vadd.f32 %v1308, %v1350
    %1352 = vdwg.mxu0
    %v1353 = vmax.f32 %v1259, 0.0
    %v1354 = vmax.f32 %v1261, 0.0
    %v1355 = vmax.f32 %v1345, 0.0
    %v1356 = vmax.f32 %v1347, 0.0
    %v1357 = vmax.f32 %v1263, 0.0
    %v1358 = vmax.f32 %v1265, 0.0
    %v1359 = vmax.f32 %v1349, 0.0
    %v1360 = vmax.f32 %v1351, 0.0
    %v1361 = vpack.c.bf16 %v1357, %v1353
    %v1362 = vpack.c.bf16 %v1358, %v1354
    %v1363 = vpack.c.bf16 %v1359, %v1355
    %v1364 = vpack.c.bf16 %v1360, %v1356
    %v1365 = vld [vmem:[#allocation7] sm:$0xff]
    %v1366 = vld [vmem:[#allocation7 + $0x8] sm:$0xff]
    %v1367 = vld [vmem:[#allocation7 + $0x10] sm:$0xff]
    %v1368 = vld [vmem:[#allocation7 + $0x18] sm:$0xff]
    %v1369 = vld [vmem:[#allocation7 + $0x20] sm:$0xff]
    %v1370 = vld [vmem:[#allocation7 + $0x28] sm:$0xff]
    %v1371 = vld [vmem:[#allocation7 + $0x30] sm:$0xff]
    %v1372 = vld [vmem:[#allocation7 + $0x38] sm:$0xff]
    %v1373 = vld [vmem:[#allocation7 + $0x40] sm:$0xff]
    %v1374 = vld [vmem:[#allocation7 + $0x48] sm:$0xff]
    %v1375 = vld [vmem:[#allocation7 + $0x50] sm:$0xff]
    %v1376 = vld [vmem:[#allocation7 + $0x58] sm:$0xff]
    %v1377 = vld [vmem:[#allocation7 + $0x60] sm:$0xff]
    %v1378 = vld [vmem:[#allocation7 + $0x68] sm:$0xff]
    %v1379 = vld [vmem:[#allocation7 + $0x70] sm:$0xff]
    %v1380 = vld [vmem:[#allocation7 + $0x78] sm:$0xff]
    %v1381 = vld [vmem:[#allocation7 + $0x80] sm:$0xff]
    %v1382 = vld [vmem:[#allocation7 + $0x88] sm:$0xff]
    %v1383 = vld [vmem:[#allocation7 + $0x90] sm:$0xff]
    %v1384 = vld [vmem:[#allocation7 + $0x98] sm:$0xff]
    %v1385 = vld [vmem:[#allocation7 + $0xa0] sm:$0xff]
    %v1386 = vld [vmem:[#allocation7 + $0xa8] sm:$0xff]
    %v1387 = vld [vmem:[#allocation7 + $0xb0] sm:$0xff]
    %v1388 = vld [vmem:[#allocation7 + $0xb8] sm:$0xff]
    %v1389 = vld [vmem:[#allocation7 + $0xc0] sm:$0xff]
    %v1390 = vld [vmem:[#allocation7 + $0xc8] sm:$0xff]
    %v1391 = vld [vmem:[#allocation7 + $0xd0] sm:$0xff]
    %v1392 = vld [vmem:[#allocation7 + $0xd8] sm:$0xff]
    %v1393 = vld [vmem:[#allocation7 + $0xe0] sm:$0xff]
    %v1394 = vld [vmem:[#allocation7 + $0xe8] sm:$0xff]
    %v1395 = vld [vmem:[#allocation7 + $0xf0] sm:$0xff]
    %v1396 = vld [vmem:[#allocation7 + $0xf8] sm:$0xff]
    %v1397 = vld [vmem:[#allocation7 + $0x100] sm:$0xff]
    %v1398 = vld [vmem:[#allocation7 + $0x108] sm:$0xff]
    %v1399 = vld [vmem:[#allocation7 + $0x110] sm:$0xff]
    %v1400 = vld [vmem:[#allocation7 + $0x118] sm:$0xff]
    %v1401 = vld [vmem:[#allocation7 + $0x120] sm:$0xff]
    %v1402 = vld [vmem:[#allocation7 + $0x128] sm:$0xff]
    %v1403 = vld [vmem:[#allocation7 + $0x130] sm:$0xff]
    %v1404 = vld [vmem:[#allocation7 + $0x138] sm:$0xff]
    %v1405 = vld [vmem:[#allocation7 + $0x140] sm:$0xff]
    %v1406 = vld [vmem:[#allocation7 + $0x148] sm:$0xff]
    %v1407 = vld [vmem:[#allocation7 + $0x150] sm:$0xff]
    %v1408 = vld [vmem:[#allocation7 + $0x158] sm:$0xff]
    %v1409 = vld [vmem:[#allocation7 + $0x160] sm:$0xff]
    %v1410 = vld [vmem:[#allocation7 + $0x168] sm:$0xff]
    %v1411 = vld [vmem:[#allocation7 + $0x170] sm:$0xff]
    %v1412 = vld [vmem:[#allocation7 + $0x178] sm:$0xff]
    %v1413 = vld [vmem:[#allocation7 + $0x180] sm:$0xff]
    %v1414 = vld [vmem:[#allocation7 + $0x188] sm:$0xff]
    %v1415 = vld [vmem:[#allocation7 + $0x190] sm:$0xff]
    %v1416 = vld [vmem:[#allocation7 + $0x198] sm:$0xff]
    %v1417 = vld [vmem:[#allocation7 + $0x1a0] sm:$0xff]
    %v1418 = vld [vmem:[#allocation7 + $0x1a8] sm:$0xff]
    %v1419 = vld [vmem:[#allocation7 + $0x1b0] sm:$0xff]
    %v1420 = vld [vmem:[#allocation7 + $0x1b8] sm:$0xff]
    %v1421 = vld [vmem:[#allocation7 + $0x1c0] sm:$0xff]
    %v1422 = vld [vmem:[#allocation7 + $0x1c8] sm:$0xff]
    %v1423 = vld [vmem:[#allocation7 + $0x1d0] sm:$0xff]
    %v1424 = vld [vmem:[#allocation7 + $0x1d8] sm:$0xff]
    %v1425 = vld [vmem:[#allocation7 + $0x1e0] sm:$0xff]
    %v1426 = vld [vmem:[#allocation7 + $0x1e8] sm:$0xff]
    %v1427 = vld [vmem:[#allocation7 + $0x1f0] sm:$0xff]
    %v1428 = vld [vmem:[#allocation7 + $0x1f8] sm:$0xff]
    %v1429 = vld [vmem:[#allocation7 + $0x200] sm:$0xff]
    %v1430 = vld [vmem:[#allocation7 + $0x208] sm:$0xff]
    %v1431 = vld [vmem:[#allocation7 + $0x210] sm:$0xff]
    %v1432 = vld [vmem:[#allocation7 + $0x218] sm:$0xff]
    %v1433 = vld [vmem:[#allocation7 + $0x220] sm:$0xff]
    %v1434 = vld [vmem:[#allocation7 + $0x228] sm:$0xff]
    %v1435 = vld [vmem:[#allocation7 + $0x230] sm:$0xff]
    %v1436 = vld [vmem:[#allocation7 + $0x238] sm:$0xff]
    %v1437 = vld [vmem:[#allocation7 + $0x240] sm:$0xff]
    %v1438 = vld [vmem:[#allocation7 + $0x248] sm:$0xff]
    %v1439 = vld [vmem:[#allocation7 + $0x250] sm:$0xff]
    %v1440 = vld [vmem:[#allocation7 + $0x258] sm:$0xff]
    %v1441 = vld [vmem:[#allocation7 + $0x260] sm:$0xff]
    %v1442 = vld [vmem:[#allocation7 + $0x268] sm:$0xff]
    %v1443 = vld [vmem:[#allocation7 + $0x270] sm:$0xff]
    %v1444 = vld [vmem:[#allocation7 + $0x278] sm:$0xff]
    %v1445 = vld [vmem:[#allocation7 + $0x280] sm:$0xff]
    %v1446 = vld [vmem:[#allocation7 + $0x288] sm:$0xff]
    %v1447 = vld [vmem:[#allocation7 + $0x290] sm:$0xff]
    %v1448 = vld [vmem:[#allocation7 + $0x298] sm:$0xff]
    %v1449 = vld [vmem:[#allocation7 + $0x2a0] sm:$0xff]
    %v1450 = vld [vmem:[#allocation7 + $0x2a8] sm:$0xff]
    %v1451 = vld [vmem:[#allocation7 + $0x2b0] sm:$0xff]
    %v1452 = vld [vmem:[#allocation7 + $0x2b8] sm:$0xff]
    %v1453 = vld [vmem:[#allocation7 + $0x2c0] sm:$0xff]
    %v1454 = vld [vmem:[#allocation7 + $0x2c8] sm:$0xff]
    %v1455 = vld [vmem:[#allocation7 + $0x2d0] sm:$0xff]
    %v1456 = vld [vmem:[#allocation7 + $0x2d8] sm:$0xff]
    %v1457 = vld [vmem:[#allocation7 + $0x2e0] sm:$0xff]
    %v1458 = vld [vmem:[#allocation7 + $0x2e8] sm:$0xff]
    %v1459 = vld [vmem:[#allocation7 + $0x2f0] sm:$0xff]
    %v1460 = vld [vmem:[#allocation7 + $0x2f8] sm:$0xff]
    %v1461 = vld [vmem:[#allocation7 + $0x300] sm:$0xff]
    %v1462 = vld [vmem:[#allocation7 + $0x308] sm:$0xff]
    %v1463 = vld [vmem:[#allocation7 + $0x310] sm:$0xff]
    %v1464 = vld [vmem:[#allocation7 + $0x318] sm:$0xff]
    %v1465 = vld [vmem:[#allocation7 + $0x320] sm:$0xff]
    %v1466 = vld [vmem:[#allocation7 + $0x328] sm:$0xff]
    %v1467 = vld [vmem:[#allocation7 + $0x330] sm:$0xff]
    %v1468 = vld [vmem:[#allocation7 + $0x338] sm:$0xff]
    %v1469 = vld [vmem:[#allocation7 + $0x340] sm:$0xff]
    %v1470 = vld [vmem:[#allocation7 + $0x348] sm:$0xff]
    %v1471 = vld [vmem:[#allocation7 + $0x350] sm:$0xff]
    %v1472 = vld [vmem:[#allocation7 + $0x358] sm:$0xff]
    %v1473 = vld [vmem:[#allocation7 + $0x360] sm:$0xff]
    %v1474 = vld [vmem:[#allocation7 + $0x368] sm:$0xff]
    %v1475 = vld [vmem:[#allocation7 + $0x370] sm:$0xff]
    %v1476 = vld [vmem:[#allocation7 + $0x378] sm:$0xff]
    %v1477 = vld [vmem:[#allocation7 + $0x380] sm:$0xff]
    %v1478 = vld [vmem:[#allocation7 + $0x388] sm:$0xff]
    %v1479 = vld [vmem:[#allocation7 + $0x390] sm:$0xff]
    %v1480 = vld [vmem:[#allocation7 + $0x398] sm:$0xff]
    %v1481 = vld [vmem:[#allocation7 + $0x3a0] sm:$0xff]
    %v1482 = vld [vmem:[#allocation7 + $0x3a8] sm:$0xff]
    %v1483 = vld [vmem:[#allocation7 + $0x3b0] sm:$0xff]
    %v1484 = vld [vmem:[#allocation7 + $0x3b8] sm:$0xff]
    %v1485 = vld [vmem:[#allocation7 + $0x3c0] sm:$0xff]
    %v1486 = vld [vmem:[#allocation7 + $0x3c8] sm:$0xff]
    %v1487 = vld [vmem:[#allocation7 + $0x3d0] sm:$0xff]
    %v1488 = vld [vmem:[#allocation7 + $0x3d8] sm:$0xff]
    %v1489 = vld [vmem:[#allocation7 + $0x3e0] sm:$0xff]
    %v1490 = vld [vmem:[#allocation7 + $0x3e8] sm:$0xff]
    %v1491 = vld [vmem:[#allocation7 + $0x3f0] sm:$0xff]
    %v1492 = vld [vmem:[#allocation7 + $0x3f8] sm:$0xff]
    %v1493 = vld [vmem:[%s8] sm:$0xf]
    %v1495 = vlaneseq
    %v1496 = vshrl.u32 %v1495, 7
    %v1497 = vsub.s32 0, %v1496
    %v1498 = vrot.slane %v1493, %v1497
    %v1499 = vlaneseq
    %v1500 = vshrl.u32 %v1499, 7
    %v1501 = vsub.s32 1, %v1500
    %v1502 = vrot.slane %v1493, %v1501
    %v1503 = vlaneseq
    %v1504 = vshrl.u32 %v1503, 7
    %v1505 = vsub.s32 2, %v1504
    %v1506 = vrot.slane %v1493, %v1505
    %v1507 = vlaneseq
    %v1508 = vshrl.u32 %v1507, 7
    %v1509 = vsub.s32 3, %v1508
    %v1510 = vrot.slane %v1493, %v1509
    %v1643 = vunpack.c.l.b16 %v1365
    %v1644 = vunpack.c.h.b16 %v1365
    %v1645 = vunpack.c.l.b16 %v1366
    %v1646 = vunpack.c.h.b16 %v1366
    %v1647 = vunpack.c.l.b16 %v1367
    %v1648 = vunpack.c.h.b16 %v1367
    %v1649 = vunpack.c.l.b16 %v1368
    %v1650 = vunpack.c.h.b16 %v1368
    %v1651 = vunpack.c.l.b16 %v1369
    %v1652 = vunpack.c.h.b16 %v1369
    %v1653 = vunpack.c.l.b16 %v1370
    %v1654 = vunpack.c.h.b16 %v1370
    %v1655 = vunpack.c.l.b16 %v1371
    %v1656 = vunpack.c.h.b16 %v1371
    %v1657 = vunpack.c.l.b16 %v1372
    %v1658 = vunpack.c.h.b16 %v1372
    %v1659 = vunpack.c.l.b16 %v1373
    %v1660 = vunpack.c.h.b16 %v1373
    %v1661 = vunpack.c.l.b16 %v1374
    %v1662 = vunpack.c.h.b16 %v1374
    %v1663 = vunpack.c.l.b16 %v1375
    %v1664 = vunpack.c.h.b16 %v1375
    %v1665 = vunpack.c.l.b16 %v1376
    %v1666 = vunpack.c.h.b16 %v1376
    %v1667 = vunpack.c.l.b16 %v1377
    %v1668 = vunpack.c.h.b16 %v1377
    %v1669 = vunpack.c.l.b16 %v1378
    %v1670 = vunpack.c.h.b16 %v1378
    %v1671 = vunpack.c.l.b16 %v1379
    %v1672 = vunpack.c.h.b16 %v1379
    %v1673 = vunpack.c.l.b16 %v1380
    %v1674 = vunpack.c.h.b16 %v1380
    %v1675 = vunpack.c.l.b16 %v1381
    %v1676 = vunpack.c.h.b16 %v1381
    %v1677 = vunpack.c.l.b16 %v1382
    %v1678 = vunpack.c.h.b16 %v1382
    %v1679 = vunpack.c.l.b16 %v1383
    %v1680 = vunpack.c.h.b16 %v1383
    %v1681 = vunpack.c.l.b16 %v1384
    %v1682 = vunpack.c.h.b16 %v1384
    %v1683 = vunpack.c.l.b16 %v1385
    %v1684 = vunpack.c.h.b16 %v1385
    %v1685 = vunpack.c.l.b16 %v1386
    %v1686 = vunpack.c.h.b16 %v1386
    %v1687 = vunpack.c.l.b16 %v1387
    %v1688 = vunpack.c.h.b16 %v1387
    %v1689 = vunpack.c.l.b16 %v1388
    %v1690 = vunpack.c.h.b16 %v1388
    %v1691 = vunpack.c.l.b16 %v1389
    %v1692 = vunpack.c.h.b16 %v1389
    %v1693 = vunpack.c.l.b16 %v1390
    %v1694 = vunpack.c.h.b16 %v1390
    %v1695 = vunpack.c.l.b16 %v1391
    %v1696 = vunpack.c.h.b16 %v1391
    %v1697 = vunpack.c.l.b16 %v1392
    %v1698 = vunpack.c.h.b16 %v1392
    %v1699 = vunpack.c.l.b16 %v1393
    %v1700 = vunpack.c.h.b16 %v1393
    %v1701 = vunpack.c.l.b16 %v1394
    %v1702 = vunpack.c.h.b16 %v1394
    %v1703 = vunpack.c.l.b16 %v1395
    %v1704 = vunpack.c.h.b16 %v1395
    %v1705 = vunpack.c.l.b16 %v1396
    %v1706 = vunpack.c.h.b16 %v1396
    %v1707 = vunpack.c.l.b16 %v1397
    %v1708 = vunpack.c.h.b16 %v1397
    %v1709 = vunpack.c.l.b16 %v1398
    %v1710 = vunpack.c.h.b16 %v1398
    %v1711 = vunpack.c.l.b16 %v1399
    %v1712 = vunpack.c.h.b16 %v1399
    %v1713 = vunpack.c.l.b16 %v1400
    %v1714 = vunpack.c.h.b16 %v1400
    %v1715 = vunpack.c.l.b16 %v1401
    %v1716 = vunpack.c.h.b16 %v1401
    %v1717 = vunpack.c.l.b16 %v1402
    %v1718 = vunpack.c.h.b16 %v1402
    %v1719 = vunpack.c.l.b16 %v1403
    %v1720 = vunpack.c.h.b16 %v1403
    %v1721 = vunpack.c.l.b16 %v1404
    %v1722 = vunpack.c.h.b16 %v1404
    %v1723 = vunpack.c.l.b16 %v1405
    %v1724 = vunpack.c.h.b16 %v1405
    %v1725 = vunpack.c.l.b16 %v1406
    %v1726 = vunpack.c.h.b16 %v1406
    %v1727 = vunpack.c.l.b16 %v1407
    %v1728 = vunpack.c.h.b16 %v1407
    %v1729 = vunpack.c.l.b16 %v1408
    %v1730 = vunpack.c.h.b16 %v1408
    %v1731 = vunpack.c.l.b16 %v1409
    %v1732 = vunpack.c.h.b16 %v1409
    %v1733 = vunpack.c.l.b16 %v1410
    %v1734 = vunpack.c.h.b16 %v1410
    %v1735 = vunpack.c.l.b16 %v1411
    %v1736 = vunpack.c.h.b16 %v1411
    %v1737 = vunpack.c.l.b16 %v1412
    %v1738 = vunpack.c.h.b16 %v1412
    %v1739 = vunpack.c.l.b16 %v1413
    %v1740 = vunpack.c.h.b16 %v1413
    %v1741 = vunpack.c.l.b16 %v1414
    %v1742 = vunpack.c.h.b16 %v1414
    %v1743 = vunpack.c.l.b16 %v1415
    %v1744 = vunpack.c.h.b16 %v1415
    %v1745 = vunpack.c.l.b16 %v1416
    %v1746 = vunpack.c.h.b16 %v1416
    %v1747 = vunpack.c.l.b16 %v1417
    %v1748 = vunpack.c.h.b16 %v1417
    %v1749 = vunpack.c.l.b16 %v1418
    %v1750 = vunpack.c.h.b16 %v1418
    %v1751 = vunpack.c.l.b16 %v1419
    %v1752 = vunpack.c.h.b16 %v1419
    %v1753 = vunpack.c.l.b16 %v1420
    %v1754 = vunpack.c.h.b16 %v1420
    %v1755 = vunpack.c.l.b16 %v1421
    %v1756 = vunpack.c.h.b16 %v1421
    %v1757 = vunpack.c.l.b16 %v1422
    %v1758 = vunpack.c.h.b16 %v1422
    %v1759 = vunpack.c.l.b16 %v1423
    %v1760 = vunpack.c.h.b16 %v1423
    %v1761 = vunpack.c.l.b16 %v1424
    %v1762 = vunpack.c.h.b16 %v1424
    %v1763 = vunpack.c.l.b16 %v1425
    %v1764 = vunpack.c.h.b16 %v1425
    %v1765 = vunpack.c.l.b16 %v1426
    %v1766 = vunpack.c.h.b16 %v1426
    %v1767 = vunpack.c.l.b16 %v1427
    %v1768 = vunpack.c.h.b16 %v1427
    %v1769 = vunpack.c.l.b16 %v1428
    %v1770 = vunpack.c.h.b16 %v1428
    %v1771 = vunpack.c.l.b16 %v1429
    %v1772 = vunpack.c.h.b16 %v1429
    %v1773 = vunpack.c.l.b16 %v1430
    %v1774 = vunpack.c.h.b16 %v1430
    %v1775 = vunpack.c.l.b16 %v1431
    %v1776 = vunpack.c.h.b16 %v1431
    %v1777 = vunpack.c.l.b16 %v1432
    %v1778 = vunpack.c.h.b16 %v1432
    %v1779 = vunpack.c.l.b16 %v1433
    %v1780 = vunpack.c.h.b16 %v1433
    %v1781 = vunpack.c.l.b16 %v1434
    %v1782 = vunpack.c.h.b16 %v1434
    %v1783 = vunpack.c.l.b16 %v1435
    %v1784 = vunpack.c.h.b16 %v1435
    %v1785 = vunpack.c.l.b16 %v1436
    %v1786 = vunpack.c.h.b16 %v1436
    %v1787 = vunpack.c.l.b16 %v1437
    %v1788 = vunpack.c.h.b16 %v1437
    %v1789 = vunpack.c.l.b16 %v1438
    %v1790 = vunpack.c.h.b16 %v1438
    %v1791 = vunpack.c.l.b16 %v1439
    %v1792 = vunpack.c.h.b16 %v1439
    %v1793 = vunpack.c.l.b16 %v1440
    %v1794 = vunpack.c.h.b16 %v1440
    %v1795 = vunpack.c.l.b16 %v1441
    %v1796 = vunpack.c.h.b16 %v1441
    %v1797 = vunpack.c.l.b16 %v1442
    %v1798 = vunpack.c.h.b16 %v1442
    %v1799 = vunpack.c.l.b16 %v1443
    %v1800 = vunpack.c.h.b16 %v1443
    %v1801 = vunpack.c.l.b16 %v1444
    %v1802 = vunpack.c.h.b16 %v1444
    %v1803 = vunpack.c.l.b16 %v1445
    %v1804 = vunpack.c.h.b16 %v1445
    %v1805 = vunpack.c.l.b16 %v1446
    %v1806 = vunpack.c.h.b16 %v1446
    %v1807 = vunpack.c.l.b16 %v1447
    %v1808 = vunpack.c.h.b16 %v1447
    %v1809 = vunpack.c.l.b16 %v1448
    %v1810 = vunpack.c.h.b16 %v1448
    %v1811 = vunpack.c.l.b16 %v1449
    %v1812 = vunpack.c.h.b16 %v1449
    %v1813 = vunpack.c.l.b16 %v1450
    %v1814 = vunpack.c.h.b16 %v1450
    %v1815 = vunpack.c.l.b16 %v1451
    %v1816 = vunpack.c.h.b16 %v1451
    %v1817 = vunpack.c.l.b16 %v1452
    %v1818 = vunpack.c.h.b16 %v1452
    %v1819 = vunpack.c.l.b16 %v1453
    %v1820 = vunpack.c.h.b16 %v1453
    %v1821 = vunpack.c.l.b16 %v1454
    %v1822 = vunpack.c.h.b16 %v1454
    %v1823 = vunpack.c.l.b16 %v1455
    %v1824 = vunpack.c.h.b16 %v1455
    %v1825 = vunpack.c.l.b16 %v1456
    %v1826 = vunpack.c.h.b16 %v1456
    %v1827 = vunpack.c.l.b16 %v1457
    %v1828 = vunpack.c.h.b16 %v1457
    %v1829 = vunpack.c.l.b16 %v1458
    %v1830 = vunpack.c.h.b16 %v1458
    %v1831 = vunpack.c.l.b16 %v1459
    %v1832 = vunpack.c.h.b16 %v1459
    %v1833 = vunpack.c.l.b16 %v1460
    %v1834 = vunpack.c.h.b16 %v1460
    %v1835 = vunpack.c.l.b16 %v1461
    %v1836 = vunpack.c.h.b16 %v1461
    %v1837 = vunpack.c.l.b16 %v1462
    %v1838 = vunpack.c.h.b16 %v1462
    %v1839 = vunpack.c.l.b16 %v1463
    %v1840 = vunpack.c.h.b16 %v1463
    %v1841 = vunpack.c.l.b16 %v1464
    %v1842 = vunpack.c.h.b16 %v1464
    %v1843 = vunpack.c.l.b16 %v1465
    %v1844 = vunpack.c.h.b16 %v1465
    %v1845 = vunpack.c.l.b16 %v1466
    %v1846 = vunpack.c.h.b16 %v1466
    %v1847 = vunpack.c.l.b16 %v1467
    %v1848 = vunpack.c.h.b16 %v1467
    %v1849 = vunpack.c.l.b16 %v1468
    %v1850 = vunpack.c.h.b16 %v1468
    %v1851 = vunpack.c.l.b16 %v1469
    %v1852 = vunpack.c.h.b16 %v1469
    %v1853 = vunpack.c.l.b16 %v1470
    %v1854 = vunpack.c.h.b16 %v1470
    %v1855 = vunpack.c.l.b16 %v1471
    %v1856 = vunpack.c.h.b16 %v1471
    %v1857 = vunpack.c.l.b16 %v1472
    %v1858 = vunpack.c.h.b16 %v1472
    %v1859 = vunpack.c.l.b16 %v1473
    %v1860 = vunpack.c.h.b16 %v1473
    %v1861 = vunpack.c.l.b16 %v1474
    %v1862 = vunpack.c.h.b16 %v1474
    %v1863 = vunpack.c.l.b16 %v1475
    %v1864 = vunpack.c.h.b16 %v1475
    %v1865 = vunpack.c.l.b16 %v1476
    %v1866 = vunpack.c.h.b16 %v1476
    %v1867 = vunpack.c.l.b16 %v1477
    %v1868 = vunpack.c.h.b16 %v1477
    %v1869 = vunpack.c.l.b16 %v1478
    %v1870 = vunpack.c.h.b16 %v1478
    %v1871 = vunpack.c.l.b16 %v1479
    %v1872 = vunpack.c.h.b16 %v1479
    %v1873 = vunpack.c.l.b16 %v1480
    %v1874 = vunpack.c.h.b16 %v1480
    %v1875 = vunpack.c.l.b16 %v1481
    %v1876 = vunpack.c.h.b16 %v1481
    %v1877 = vunpack.c.l.b16 %v1482
    %v1878 = vunpack.c.h.b16 %v1482
    %v1879 = vunpack.c.l.b16 %v1483
    %v1880 = vunpack.c.h.b16 %v1483
    %v1881 = vunpack.c.l.b16 %v1484
    %v1882 = vunpack.c.h.b16 %v1484
    %v1883 = vunpack.c.l.b16 %v1485
    %v1884 = vunpack.c.h.b16 %v1485
    %v1885 = vunpack.c.l.b16 %v1486
    %v1886 = vunpack.c.h.b16 %v1486
    %v1887 = vunpack.c.l.b16 %v1487
    %v1888 = vunpack.c.h.b16 %v1487
    %v1889 = vunpack.c.l.b16 %v1488
    %v1890 = vunpack.c.h.b16 %v1488
    %v1891 = vunpack.c.l.b16 %v1489
    %v1892 = vunpack.c.h.b16 %v1489
    %v1893 = vunpack.c.l.b16 %v1490
    %v1894 = vunpack.c.h.b16 %v1490
    %v1895 = vunpack.c.l.b16 %v1491
    %v1896 = vunpack.c.h.b16 %v1491
    %v1897 = vunpack.c.l.b16 %v1492
    %v1898 = vunpack.c.h.b16 %v1492
    %v1899 = vpack.c.b16 %v1647, %v1643
    %v1900 = vpack.c.b16 %v1648, %v1644
    %v1901 = vpack.c.b16 %v1649, %v1645
    %v1902 = vpack.c.b16 %v1650, %v1646
    %v1903 = vpack.c.b16 %v1655, %v1651
    %v1904 = vpack.c.b16 %v1656, %v1652
    %v1905 = vpack.c.b16 %v1657, %v1653
    %v1906 = vpack.c.b16 %v1658, %v1654
    %v1907 = vpack.c.b16 %v1663, %v1659
    %v1908 = vpack.c.b16 %v1664, %v1660
    %v1909 = vpack.c.b16 %v1665, %v1661
    %v1910 = vpack.c.b16 %v1666, %v1662
    %v1911 = vpack.c.b16 %v1671, %v1667
    %v1912 = vpack.c.b16 %v1672, %v1668
    %v1913 = vpack.c.b16 %v1673, %v1669
    %v1914 = vpack.c.b16 %v1674, %v1670
    %v1915 = vpack.c.b16 %v1679, %v1675
    %v1916 = vpack.c.b16 %v1680, %v1676
    %v1917 = vpack.c.b16 %v1681, %v1677
    %v1918 = vpack.c.b16 %v1682, %v1678
    %v1919 = vpack.c.b16 %v1687, %v1683
    %v1920 = vpack.c.b16 %v1688, %v1684
    %v1921 = vpack.c.b16 %v1689, %v1685
    %v1922 = vpack.c.b16 %v1690, %v1686
    %v1923 = vpack.c.b16 %v1695, %v1691
    %v1924 = vpack.c.b16 %v1696, %v1692
    %v1925 = vpack.c.b16 %v1697, %v1693
    %v1926 = vpack.c.b16 %v1698, %v1694
    %v1927 = vpack.c.b16 %v1703, %v1699
    %v1928 = vpack.c.b16 %v1704, %v1700
    %v1929 = vpack.c.b16 %v1705, %v1701
    %v1930 = vpack.c.b16 %v1706, %v1702
    %v1931 = vpack.c.b16 %v1711, %v1707
    %v1932 = vpack.c.b16 %v1712, %v1708
    %v1933 = vpack.c.b16 %v1713, %v1709
    %v1934 = vpack.c.b16 %v1714, %v1710
    %v1935 = vpack.c.b16 %v1719, %v1715
    %v1936 = vpack.c.b16 %v1720, %v1716
    %v1937 = vpack.c.b16 %v1721, %v1717
    %v1938 = vpack.c.b16 %v1722, %v1718
    %v1939 = vpack.c.b16 %v1727, %v1723
    %v1940 = vpack.c.b16 %v1728, %v1724
    %v1941 = vpack.c.b16 %v1729, %v1725
    %v1942 = vpack.c.b16 %v1730, %v1726
    %v1943 = vpack.c.b16 %v1735, %v1731
    %v1944 = vpack.c.b16 %v1736, %v1732
    %v1945 = vpack.c.b16 %v1737, %v1733
    %v1946 = vpack.c.b16 %v1738, %v1734
    %v1947 = vpack.c.b16 %v1743, %v1739
    %v1948 = vpack.c.b16 %v1744, %v1740
    %v1949 = vpack.c.b16 %v1745, %v1741
    %v1950 = vpack.c.b16 %v1746, %v1742
    %v1951 = vpack.c.b16 %v1751, %v1747
    %v1952 = vpack.c.b16 %v1752, %v1748
    %v1953 = vpack.c.b16 %v1753, %v1749
    %v1954 = vpack.c.b16 %v1754, %v1750
    %v1955 = vpack.c.b16 %v1759, %v1755
    %v1956 = vpack.c.b16 %v1760, %v1756
    %v1957 = vpack.c.b16 %v1761, %v1757
    %v1958 = vpack.c.b16 %v1762, %v1758
    %v1959 = vpack.c.b16 %v1767, %v1763
    %v1960 = vpack.c.b16 %v1768, %v1764
    %v1961 = vpack.c.b16 %v1769, %v1765
    %v1962 = vpack.c.b16 %v1770, %v1766
    %v1963 = vpack.c.b16 %v1775, %v1771
    %v1964 = vpack.c.b16 %v1776, %v1772
    %v1965 = vpack.c.b16 %v1777, %v1773
    %v1966 = vpack.c.b16 %v1778, %v1774
    %v1967 = vpack.c.b16 %v1783, %v1779
    %v1968 = vpack.c.b16 %v1784, %v1780
    %v1969 = vpack.c.b16 %v1785, %v1781
    %v1970 = vpack.c.b16 %v1786, %v1782
    %v1971 = vpack.c.b16 %v1791, %v1787
    %v1972 = vpack.c.b16 %v1792, %v1788
    %v1973 = vpack.c.b16 %v1793, %v1789
    %v1974 = vpack.c.b16 %v1794, %v1790
    %v1975 = vpack.c.b16 %v1799, %v1795
    %v1976 = vpack.c.b16 %v1800, %v1796
    %v1977 = vpack.c.b16 %v1801, %v1797
    %v1978 = vpack.c.b16 %v1802, %v1798
    %v1979 = vpack.c.b16 %v1807, %v1803
    %v1980 = vpack.c.b16 %v1808, %v1804
    %v1981 = vpack.c.b16 %v1809, %v1805
    %v1982 = vpack.c.b16 %v1810, %v1806
    %v1983 = vpack.c.b16 %v1815, %v1811
    %v1984 = vpack.c.b16 %v1816, %v1812
    %v1985 = vpack.c.b16 %v1817, %v1813
    %v1986 = vpack.c.b16 %v1818, %v1814
    %v1987 = vpack.c.b16 %v1823, %v1819
    %v1988 = vpack.c.b16 %v1824, %v1820
    %v1989 = vpack.c.b16 %v1825, %v1821
    %v1990 = vpack.c.b16 %v1826, %v1822
    %v1991 = vpack.c.b16 %v1831, %v1827
    %v1992 = vpack.c.b16 %v1832, %v1828
    %v1993 = vpack.c.b16 %v1833, %v1829
    %v1994 = vpack.c.b16 %v1834, %v1830
    %v1995 = vpack.c.b16 %v1839, %v1835
    %v1996 = vpack.c.b16 %v1840, %v1836
    %v1997 = vpack.c.b16 %v1841, %v1837
    %v1998 = vpack.c.b16 %v1842, %v1838
    %v1999 = vpack.c.b16 %v1847, %v1843
    %v2000 = vpack.c.b16 %v1848, %v1844
    %v2001 = vpack.c.b16 %v1849, %v1845
    %v2002 = vpack.c.b16 %v1850, %v1846
    %v2003 = vpack.c.b16 %v1855, %v1851
    %v2004 = vpack.c.b16 %v1856, %v1852
    %v2005 = vpack.c.b16 %v1857, %v1853
    %v2006 = vpack.c.b16 %v1858, %v1854
    %v2007 = vpack.c.b16 %v1863, %v1859
    %v2008 = vpack.c.b16 %v1864, %v1860
    %v2009 = vpack.c.b16 %v1865, %v1861
    %v2010 = vpack.c.b16 %v1866, %v1862
    %v2011 = vpack.c.b16 %v1871, %v1867
    %v2012 = vpack.c.b16 %v1872, %v1868
    %v2013 = vpack.c.b16 %v1873, %v1869
    %v2014 = vpack.c.b16 %v1874, %v1870
    %v2015 = vpack.c.b16 %v1879, %v1875
    %v2016 = vpack.c.b16 %v1880, %v1876
    %v2017 = vpack.c.b16 %v1881, %v1877
    %v2018 = vpack.c.b16 %v1882, %v1878
    %v2019 = vpack.c.b16 %v1887, %v1883
    %v2020 = vpack.c.b16 %v1888, %v1884
    %v2021 = vpack.c.b16 %v1889, %v1885
    %v2022 = vpack.c.b16 %v1890, %v1886
    %v2023 = vpack.c.b16 %v1895, %v1891
    %v2024 = vpack.c.b16 %v1896, %v1892
    %v2025 = vpack.c.b16 %v1897, %v1893
    %v2026 = vpack.c.b16 %v1898, %v1894
    %2155 = vmatprep.subr.bf16.mxu0 %v1900
    %2156 = vmatpush1.bf16.msra.mxu0 %v1899
    %2157 = vmatprep.subr.bf16.mxu0 %v1904
    %2158 = vmatpush1.bf16.msra.mxu0 %v1903
    %2159 = vmatprep.subr.bf16.mxu0 %v1908
    %2160 = vmatpush1.bf16.msra.mxu0 %v1907
    %2161 = vmatprep.subr.bf16.mxu0 %v1912
    %2162 = vmatpush1.bf16.msra.mxu0 %v1911
    %2163 = vmatprep.subr.bf16.mxu0 %v1916
    %2164 = vmatpush1.bf16.msra.mxu0 %v1915
    %2165 = vmatprep.subr.bf16.mxu0 %v1920
    %2166 = vmatpush1.bf16.msra.mxu0 %v1919
    %2167 = vmatprep.subr.bf16.mxu0 %v1924
    %2168 = vmatpush1.bf16.msra.mxu0 %v1923
    %2169 = vmatprep.subr.bf16.mxu0 %v1928
    %2170 = vmatpush1.bf16.msra.mxu0 %v1927
    %2171 = vmatprep.subr.bf16.mxu0 %v1932
    %2172 = vmatpush1.bf16.msra.mxu0 %v1931
    %2173 = vmatprep.subr.bf16.mxu0 %v1936
    %2174 = vmatpush1.bf16.msra.mxu0 %v1935
    %2175 = vmatprep.subr.bf16.mxu0 %v1940
    %2176 = vmatpush1.bf16.msra.mxu0 %v1939
    %2177 = vmatprep.subr.bf16.mxu0 %v1944
    %2178 = vmatpush1.bf16.msra.mxu0 %v1943
    %2179 = vmatprep.subr.bf16.mxu0 %v1948
    %2180 = vmatpush1.bf16.msra.mxu0 %v1947
    %2181 = vmatprep.subr.bf16.mxu0 %v1952
    %2182 = vmatpush1.bf16.msra.mxu0 %v1951
    %2183 = vmatprep.subr.bf16.mxu0 %v1956
    %2184 = vmatpush1.bf16.msra.mxu0 %v1955
    %2185 = vmatprep.subr.bf16.mxu0 %v1960
    %2186 = vmatpush1.bf16.msra.mxu0 %v1959
    %2187 = vmatprep.mubr.bf16.mxu0 %v1362
    %2188 = vmatmul.mubr.bf16.gmra.mrb[0].mxu0 %v1361
    %v2189 = vpop.f32.mrb[0].mxu0
    %v2190 = vadd.f32 %v1498, %v2189
    %v2191 = vpop.f32.mrb[0].mxu0
    %v2192 = vadd.f32 %v1502, %v2191
    %v2193 = vpop.f32.mrb[0].mxu0
    %v2194 = vadd.f32 %v1498, %v2193
    %v2195 = vpop.f32.mrb[0].mxu0
    %v2196 = vadd.f32 %v1502, %v2195
    %2197 = vdwg.mxu0
    %2198 = vmatprep.subr.bf16.mxu0 %v1964
    %2199 = vmatpush1.bf16.msra.mxu0 %v1963
    %2200 = vmatprep.subr.bf16.mxu0 %v1968
    %2201 = vmatpush1.bf16.msra.mxu0 %v1967
    %2202 = vmatprep.subr.bf16.mxu0 %v1972
    %2203 = vmatpush1.bf16.msra.mxu0 %v1971
    %2204 = vmatprep.subr.bf16.mxu0 %v1976
    %2205 = vmatpush1.bf16.msra.mxu0 %v1975
    %2206 = vmatprep.subr.bf16.mxu0 %v1980
    %2207 = vmatpush1.bf16.msra.mxu0 %v1979
    %2208 = vmatprep.subr.bf16.mxu0 %v1984
    %2209 = vmatpush1.bf16.msra.mxu0 %v1983
    %2210 = vmatprep.subr.bf16.mxu0 %v1988
    %2211 = vmatpush1.bf16.msra.mxu0 %v1987
    %2212 = vmatprep.subr.bf16.mxu0 %v1992
    %2213 = vmatpush1.bf16.msra.mxu0 %v1991
    %2214 = vmatprep.subr.bf16.mxu0 %v1996
    %2215 = vmatpush1.bf16.msra.mxu0 %v1995
    %2216 = vmatprep.subr.bf16.mxu0 %v2000
    %2217 = vmatpush1.bf16.msra.mxu0 %v1999
    %2218 = vmatprep.subr.bf16.mxu0 %v2004
    %2219 = vmatpush1.bf16.msra.mxu0 %v2003
    %2220 = vmatprep.subr.bf16.mxu0 %v2008
    %2221 = vmatpush1.bf16.msra.mxu0 %v2007
    %2222 = vmatprep.subr.bf16.mxu0 %v2012
    %2223 = vmatpush1.bf16.msra.mxu0 %v2011
    %2224 = vmatprep.subr.bf16.mxu0 %v2016
    %2225 = vmatpush1.bf16.msra.mxu0 %v2015
    %2226 = vmatprep.subr.bf16.mxu0 %v2020
    %2227 = vmatpush1.bf16.msra.mxu0 %v2019
    %2228 = vmatprep.subr.bf16.mxu0 %v2024
    %2229 = vmatpush1.bf16.msra.mxu0 %v2023
    %2230 = vmatprep.mubr.bf16.mxu0 %v1364
    %2231 = vmatmul.mubr.bf16.gmra.mrb[0].mxu0 %v1363
    %v2232 = vpop.f32.mrb[0].mxu0
    %v2233 = vadd.f32 %v2190, %v2232
    %v2234 = vpop.f32.mrb[0].mxu0
    %v2235 = vadd.f32 %v2192, %v2234
    %v2236 = vpop.f32.mrb[0].mxu0
    %v2237 = vadd.f32 %v2194, %v2236
    %v2238 = vpop.f32.mrb[0].mxu0
    %v2239 = vadd.f32 %v2196, %v2238
    %2240 = vdwg.mxu0
    %2241 = vmatprep.subr.bf16.mxu0 %v1902
    %2242 = vmatpush1.bf16.msra.mxu0 %v1901
    %2243 = vmatprep.subr.bf16.mxu0 %v1906
    %2244 = vmatpush1.bf16.msra.mxu0 %v1905
    %2245 = vmatprep.subr.bf16.mxu0 %v1910
    %2246 = vmatpush1.bf16.msra.mxu0 %v1909
    %2247 = vmatprep.subr.bf16.mxu0 %v1914
    %2248 = vmatpush1.bf16.msra.mxu0 %v1913
    %2249 = vmatprep.subr.bf16.mxu0 %v1918
    %2250 = vmatpush1.bf16.msra.mxu0 %v1917
    %2251 = vmatprep.subr.bf16.mxu0 %v1922
    %2252 = vmatpush1.bf16.msra.mxu0 %v1921
    %2253 = vmatprep.subr.bf16.mxu0 %v1926
    %2254 = vmatpush1.bf16.msra.mxu0 %v1925
    %2255 = vmatprep.subr.bf16.mxu0 %v1930
    %2256 = vmatpush1.bf16.msra.mxu0 %v1929
    %2257 = vmatprep.subr.bf16.mxu0 %v1934
    %2258 = vmatpush1.bf16.msra.mxu0 %v1933
    %2259 = vmatprep.subr.bf16.mxu0 %v1938
    %2260 = vmatpush1.bf16.msra.mxu0 %v1937
    %2261 = vmatprep.subr.bf16.mxu0 %v1942
    %2262 = vmatpush1.bf16.msra.mxu0 %v1941
    %2263 = vmatprep.subr.bf16.mxu0 %v1946
    %2264 = vmatpush1.bf16.msra.mxu0 %v1945
    %2265 = vmatprep.subr.bf16.mxu0 %v1950
    %2266 = vmatpush1.bf16.msra.mxu0 %v1949
    %2267 = vmatprep.subr.bf16.mxu0 %v1954
    %2268 = vmatpush1.bf16.msra.mxu0 %v1953
    %2269 = vmatprep.subr.bf16.mxu0 %v1958
    %2270 = vmatpush1.bf16.msra.mxu0 %v1957
    %2271 = vmatprep.subr.bf16.mxu0 %v1962
    %2272 = vmatpush1.bf16.msra.mxu0 %v1961
    %2273 = vmatprep.mubr.bf16.mxu0 %v1362
    %2274 = vmatmul.mubr.bf16.gmra.mrb[0].mxu0 %v1361
    %v2275 = vpop.f32.mrb[0].mxu0
    %v2276 = vadd.f32 %v1506, %v2275
    %v2277 = vpop.f32.mrb[0].mxu0
    %v2278 = vadd.f32 %v1510, %v2277
    %v2279 = vpop.f32.mrb[0].mxu0
    %v2280 = vadd.f32 %v1506, %v2279
    %v2281 = vpop.f32.mrb[0].mxu0
    %v2282 = vadd.f32 %v1510, %v2281
    %2283 = vdwg.mxu0
    %2284 = vmatprep.subr.bf16.mxu0 %v1966
    %2285 = vmatpush1.bf16.msra.mxu0 %v1965
    %2286 = vmatprep.subr.bf16.mxu0 %v1970
    %2287 = vmatpush1.bf16.msra.mxu0 %v1969
    %2288 = vmatprep.subr.bf16.mxu0 %v1974
    %2289 = vmatpush1.bf16.msra.mxu0 %v1973
    %2290 = vmatprep.subr.bf16.mxu0 %v1978
    %2291 = vmatpush1.bf16.msra.mxu0 %v1977
    %2292 = vmatprep.subr.bf16.mxu0 %v1982
    %2293 = vmatpush1.bf16.msra.mxu0 %v1981
    %2294 = vmatprep.subr.bf16.mxu0 %v1986
    %2295 = vmatpush1.bf16.msra.mxu0 %v1985
    %2296 = vmatprep.subr.bf16.mxu0 %v1990
    %2297 = vmatpush1.bf16.msra.mxu0 %v1989
    %2298 = vmatprep.subr.bf16.mxu0 %v1994
    %2299 = vmatpush1.bf16.msra.mxu0 %v1993
    %2300 = vmatprep.subr.bf16.mxu0 %v1998
    %2301 = vmatpush1.bf16.msra.mxu0 %v1997
    %2302 = vmatprep.subr.bf16.mxu0 %v2002
    %2303 = vmatpush1.bf16.msra.mxu0 %v2001
    %2304 = vmatprep.subr.bf16.mxu0 %v2006
    %2305 = vmatpush1.bf16.msra.mxu0 %v2005
    %2306 = vmatprep.subr.bf16.mxu0 %v2010
    %2307 = vmatpush1.bf16.msra.mxu0 %v2009
    %2308 = vmatprep.subr.bf16.mxu0 %v2014
    %2309 = vmatpush1.bf16.msra.mxu0 %v2013
    %2310 = vmatprep.subr.bf16.mxu0 %v2018
    %2311 = vmatpush1.bf16.msra.mxu0 %v2017
    %2312 = vmatprep.subr.bf16.mxu0 %v2022
    %2313 = vmatpush1.bf16.msra.mxu0 %v2021
    %2314 = vmatprep.subr.bf16.mxu0 %v2026
    %2315 = vmatpush1.bf16.msra.mxu0 %v2025
    %2316 = vmatprep.mubr.bf16.mxu0 %v1364
    %2317 = vmatmul.mubr.bf16.gmra.mrb[0].mxu0 %v1363
    %v2318 = vpop.f32.mrb[0].mxu0
    %v2319 = vadd.f32 %v2276, %v2318
    %v2320 = vpop.f32.mrb[0].mxu0
    %v2321 = vadd.f32 %v2278, %v2320
    %v2322 = vpop.f32.mrb[0].mxu0
    %v2323 = vadd.f32 %v2280, %v2322
    %v2324 = vpop.f32.mrb[0].mxu0
    %v2325 = vadd.f32 %v2282, %v2324
    %2326 = vdwg.mxu0
    %v2327 = vmax.f32 %v2233, 0.0
    %v2328 = vmax.f32 %v2235, 0.0
    %v2329 = vmax.f32 %v2319, 0.0
    %v2330 = vmax.f32 %v2321, 0.0
    %v2331 = vmax.f32 %v2237, 0.0
    %v2332 = vmax.f32 %v2239, 0.0
    %v2333 = vmax.f32 %v2323, 0.0
    %v2334 = vmax.f32 %v2325, 0.0
    %v2335 = vld [vmem:[%s9] sm:$0xf]
    %v2336 = vunpack.c.l.bf16 %v2335
    %v2338 = vlaneseq
    %v2339 = vshrl.u32 %v2338, 7
    %v2340 = vsub.s32 0, %v2339
    %v2341 = vrot.slane %v2336, %v2340
    %v2342 = vlaneseq
    %v2343 = vshrl.u32 %v2342, 7
    %v2344 = vsub.s32 2, %v2343
    %v2345 = vrot.slane %v2336, %v2344
    %v2346 = vlaneseq
    %v2347 = vshrl.u32 %v2346, 7
    %v2348 = vsub.s32 4, %v2347
    %v2349 = vrot.slane %v2336, %v2348
    %v2350 = vlaneseq
    %v2351 = vshrl.u32 %v2350, 7
    %v2352 = vsub.s32 6, %v2351
    %v2353 = vrot.slane %v2336, %v2352
    %v2358 = vlaneseq
    %v2359 = vshrl.u32 %v2358, 7
    %v2360 = vsub.s32 0, %v2359
    %v2361 = vrot.slane %v2341, %v2360
    %v2362 = vlaneseq
    %v2363 = vshrl.u32 %v2362, 7
    %v2364 = vsub.s32 0, %v2363
    %v2365 = vrot.slane %v2345, %v2364
    %v2366 = vlaneseq
    %v2367 = vshrl.u32 %v2366, 7
    %v2368 = vsub.s32 0, %v2367
    %v2369 = vrot.slane %v2349, %v2368
    %v2370 = vlaneseq
    %v2371 = vshrl.u32 %v2370, 7
    %v2372 = vsub.s32 0, %v2371
    %v2373 = vrot.slane %v2353, %v2372
    %v2374 = vmul.f32 %v2327, %v2361
    %v2375 = vmul.f32 %v2328, %v2365
    %v2376 = vmul.f32 %v2329, %v2369
    %v2377 = vmul.f32 %v2330, %v2373
    %v2378 = vmul.f32 %v2331, %v2361
    %v2379 = vmul.f32 %v2332, %v2365
    %v2380 = vmul.f32 %v2333, %v2369
    %v2381 = vmul.f32 %v2334, %v2373
    %v2382 = vadd.f32 %v2374, %v2375
    %v2383 = vadd.f32 %v2382, %v2376
    %v2384 = vadd.f32 %v2383, %v2377
    %2385 = vadd.xlane.f32.xlu0 %v2384
    %v2386 = vpop.xlane.xlu0 %2385
    %v2387 = vadd.f32 %v2378, %v2379
    %v2388 = vadd.f32 %v2387, %v2380
    %v2389 = vadd.f32 %v2388, %v2381
    %2390 = vadd.xlane.f32.xlu0 %v2389
    %v2391 = vpop.xlane.xlu0 %2390
    %v2392 = vld [vmem:[#allocation2] sm:$0x1]
    %v2394 = vlaneseq
    %v2395 = vshrl.u32 %v2394, 7
    %v2396 = vsub.s32 0, %v2395
    %v2397 = vrot.slane %v2392, %v2396
    %v2399 = vadd.f32 %v2386, %v2397
    %v2400 = vadd.f32 %v2391, %v2397
    %vm2401 = vcmask 7168
    %2402 = vst.msk [vmem:[%s11] sm:$0xff] %vm2401, %v2399
    %2403 = vst.msk [vmem:[%s11 + $0x8] sm:$0xff] %vm2401, %v2400
    // Predicated region
    $region58: #{tpu_custom_call.1} parent=1 // pred_check
      _
    $region59: #{tpu_custom_call.1} parent=1 // pred_check_branch
      %2405 = sbr.rel (0) target = $region61
    $region60: #{tpu_custom_call.1} parent=1 // pred_region
      _
    $region61: #{tpu_custom_call.1} parent=1 // pred_fallthru
      _
    // Predicated region
    $region62: #{tpu_custom_call.1} parent=1 // pred_check
      _
    $region63: #{tpu_custom_call.1} parent=1 // pred_check_branch
      %2407 = sbr.rel (0) target = $region65
    $region64: #{tpu_custom_call.1} parent=1 // pred_region
      _
    $region65: #{tpu_custom_call.1} parent=1 // pred_fallthru
      _
    %2408 = vsyncpa [#allocation4], 1
    %2409 = vsyncpa [#allocation6], 1

</llo_original>
